<compile_context>
chip_gen: v7x
topology: tpu7x:2x2x1
jax: 0.10.0
libtpu: 0.0.40
codegen_flags: <defaults>
</compile_context>

<pallas_src>
import functools

import jax
import jax.numpy as jnp
from jax.experimental import pallas as pl
from jax.experimental.pallas import tpu as pltpu

_LANE = 128


def _round_up(x, m):
    return ((x + m - 1) // m) * m


def _pad2(x, rows, cols):
    return jnp.pad(x, ((0, rows - x.shape[0]), (0, cols - x.shape[1])))


def _vmem_budget():
    """(vmem_limit_bytes, aggregate working-set budget), gated per TPU generation."""
    try:
        cap = int(pltpu.get_tpu_info().vmem_capacity_bytes)
    except Exception:
        cap = 64 * 1024 * 1024                      # conservative (v7x-sized) fallback
    if cap >= 100 * 1024 * 1024:                    # v5e / v6e: 128 MiB physical VMEM
        return 96 * 1024 * 1024, 72 * 1024 * 1024
    return 48 * 1024 * 1024, 36 * 1024 * 1024       # v7x: 64 MiB per TensorCore


def _largest_tile(n_pad, candidates):
    for c in candidates:
        if n_pad % c == 0:
            return c
    return n_pad


def _agg_vmem_bytes(tm, tk, n_pad, f_pad, xw_resident, use_linear):
    a_bytes = 2 * tm * tk                                     # int8 A tile, double-buffered
    xw_bytes = (2 * n_pad * f_pad * 2) if xw_resident else (2 * tk * f_pad * 2)
    lin_bytes = 2 * tm * f_pad * 2 if use_linear else 0
    out_bytes = 2 * tm * f_pad * 4                            # worst case f32 output
    acc_bytes = tm * f_pad * 4
    misc = 4 * tm * 4 + 6 * f_pad * 4                         # d rows, bias/scale/shift
    return a_bytes + xw_bytes + lin_bytes + out_bytes + acc_bytes + misc


def _choose_agg_tiles(n_pad, f_pad, budget, use_linear):
    """Pick (tm, tk, xw_resident): biggest A tile that fits the VMEM budget.

    n_pad is only a multiple of 128 (no 512-rounding blow-up); tm/tk must divide it.
    tm is kept <= n_pad/2 (when possible) so the 'parallel' row axis has >= 2 tiles
    to load-balance across the two v7x TensorCores.
    """
    xw_resident = (2 * n_pad * f_pad * 2) <= budget // 2
    best = None
    for tm in (1024, 512, 256, 128):
        if n_pad % tm:
            continue
        if n_pad >= 256 and tm > n_pad // 2:
            continue
        for tk in (4096, 2048, 1024, 512, 256, 128):
            if n_pad % tk:
                continue
            if _agg_vmem_bytes(tm, tk, n_pad, f_pad, xw_resident, use_linear) > budget:
                continue
            if (best is None or tm * tk > best[0] * best[1]
                    or (tm * tk == best[0] * best[1] and tk > best[1])):
                best = (tm, tk)
    if best is None:
        best = (min(128, n_pad), min(128, n_pad))
    return best[0], best[1], xw_resident


# ----------------------------------------------------------------------------
# Kernel 1: feature transform  [XW | LIN] = h @ [W | W_lin],  XW scaled by d_j
# ----------------------------------------------------------------------------
def _make_transform_kernel(use_linear):
    if use_linear:
        def kernel(h_ref, w_ref, d_ref, xw_ref, lin_ref):
            full = jnp.dot(h_ref[...], w_ref[...],
                           preferred_element_type=jnp.float32)
            f = xw_ref.shape[1]                       # lane-aligned split (multiple of 128)
            xw_ref[...] = (full[:, :f] * d_ref[...]).astype(xw_ref.dtype)
            lin_ref[...] = full[:, f:].astype(lin_ref.dtype)
    else:
        def kernel(h_ref, w_ref, d_ref, xw_ref):
            full = jnp.dot(h_ref[...], w_ref[...],
                           preferred_element_type=jnp.float32)
            xw_ref[...] = (full * d_ref[...]).astype(xw_ref.dtype)
    return kernel


def _transform(h, w_cat, d_col, f_pad, *, use_linear, vmem_limit):
    n_pad, f_in = h.shape
    tm = _largest_tile(n_pad, (512, 256, 128))
    grid = (n_pad // tm,)
    in_specs = [pl.BlockSpec((tm, f_in), lambda i: (i, 0)),
                pl.BlockSpec((f_in, w_cat.shape[1]), lambda i: (0, 0)),   # resident weights
                pl.BlockSpec((tm, 1), lambda i: (i, 0))]                  # d_j (src norm)
    out_spec = pl.BlockSpec((tm, f_pad), lambda i: (i, 0))
    if use_linear:
        out_shape = (jax.ShapeDtypeStruct((n_pad, f_pad), jnp.bfloat16),
                     jax.ShapeDtypeStruct((n_pad, f_pad), jnp.bfloat16))
        out_specs = (out_spec, out_spec)
    else:
        out_shape = jax.ShapeDtypeStruct((n_pad, f_pad), jnp.bfloat16)
        out_specs = out_spec
    return pl.pallas_call(
        _make_transform_kernel(use_linear),
        out_shape=out_shape,
        grid_spec=pltpu.PrefetchScalarGridSpec(
            num_scalar_prefetch=0, grid=grid,
            in_specs=in_specs, out_specs=out_specs),
        compiler_params=pltpu.CompilerParams(
            dimension_semantics=("parallel",),
            vmem_limit_bytes=vmem_limit),
    )(h, w_cat, d_col)


# ----------------------------------------------------------------------------
# Kernel 2: aggregation + fused epilogue  out = epi( d_i * (A @ XW) + LIN )
# ----------------------------------------------------------------------------
def _make_aggregate_kernel(use_linear, use_bias, bn_relu, xw_resident, tk):
    def kernel(*refs):
        it = iter(refs)
        a_ref = next(it)
        xw_ref = next(it)
        d_ref = next(it)
        lin_ref = next(it) if use_linear else None
        bias_ref = next(it) if use_bias else None
        scale_ref = next(it) if bn_relu else None
        shift_ref = next(it) if bn_relu else None
        o_ref = next(it)
        acc_ref = next(it)

        k = pl.program_id(1)

        if xw_resident:
            start = pl.multiple_of(k * tk, tk)
            xw = xw_ref[pl.ds(start, tk), :]          # VMEM-resident XW, no HBM re-stream
        else:
            xw = xw_ref[...]

        # A is stored as exact binary int8 (halves the dominant N^2 HBM stream);
        # cast the tile to bf16 in-kernel to feed the MXU.
        prod = jnp.dot(a_ref[...].astype(jnp.bfloat16), xw,
                       preferred_element_type=jnp.float32)

        @pl.when(k == 0)
        def _():
            acc_ref[...] = prod                       # write-through: no zero store

        @pl.when(k != 0)
        def _():
            acc_ref[...] += prod

        @pl.when(k == pl.num_programs(1) - 1)
        def _():
            out = acc_ref[...] * d_ref[...]           # dst-side D^-1/2 (row scale)
            if use_linear:
                out = out + lin_ref[...].astype(jnp.float32)
            if use_bias:
                out = out + bias_ref[...]             # GraphConv bias (last layer)
            if bn_relu:
                # BatchNorm1d (eval) folded into scale/shift, then ReLU.
                out = jnp.maximum(out * scale_ref[...] + shift_ref[...], 0.0)
            o_ref[...] = out.astype(o_ref.dtype)

    return kernel


def _aggregate(a, xw, d_col, lin, bias, scale, shift, *, tm, tk, xw_resident,
               use_linear, use_bias, bn_relu, out_dtype, vmem_limit):
    n_pad = a.shape[0]
    f_pad = xw.shape[1]
    grid = (n_pad // tm, n_pad // tk)

    in_specs = [pl.BlockSpec((tm, tk), lambda i, k: (i, k))]            # A tile (int8)
    if xw_resident:
        in_specs.append(pl.BlockSpec((n_pad, f_pad), lambda i, k: (0, 0)))   # resident XW
    else:
        in_specs.append(pl.BlockSpec((tk, f_pad), lambda i, k: (k, 0)))      # streamed XW
    in_specs.append(pl.BlockSpec((tm, 1), lambda i, k: (i, 0)))         # d_i (dst norm)
    args = [a, xw, d_col]
    if use_linear:
        in_specs.append(pl.BlockSpec((tm, f_pad), lambda i, k: (i, 0)))
        args.append(lin)
    if use_bias:
        in_specs.append(pl.BlockSpec((1, f_pad), lambda i, k: (0, 0)))
        args.append(bias)
    if bn_relu:
        in_specs += [pl.BlockSpec((1, f_pad), lambda i, k: (0, 0))] * 2
        args += [scale, shift]

    return pl.pallas_call(
        _make_aggregate_kernel(use_linear, use_bias, bn_relu, xw_resident, tk),
        out_shape=jax.ShapeDtypeStruct((n_pad, f_pad), out_dtype),
        grid_spec=pltpu.PrefetchScalarGridSpec(
            num_scalar_prefetch=0, grid=grid,
            in_specs=in_specs,
            out_specs=pl.BlockSpec((tm, f_pad), lambda i, k: (i, 0)),
            scratch_shapes=[pltpu.VMEM((tm, f_pad), jnp.float32)]),
        compiler_params=pltpu.CompilerParams(
            dimension_semantics=("parallel", "arbitrary"),
            vmem_limit_bytes=vmem_limit),
    )(*args)


# ----------------------------------------------------------------------------
# Full forward (eval mode)
# ----------------------------------------------------------------------------
def gcn_forward(adj, feat, params, *, use_linear=True):
    """adj: dense binary {0,1} adjacency (GraphConv normalizes internally)."""
    n = feat.shape[0]
    n_classes = params[-1]["w"].shape[1]
    n_pad = _round_up(max(n, _LANE), _LANE)       # tight 128-rounding (no 512 blow-up)
    vmem_limit, budget = _vmem_budget()

    # norm='both': pull D^-1/2 out of A so the N^2 stream is the exact binary
    # structure stored in int8.  Padded columns of A stay exactly zero and padded
    # entries of d are zero, so padded rows/columns can never leak into real rows.
    adj_f = adj.astype(jnp.float32)
    deg = jnp.maximum(adj_f.sum(axis=1), 1.0)
    d = 1.0 / jnp.sqrt(deg)
    d_col = _pad2(d[:, None], n_pad, 1)                                  # (n_pad, 1) f32
    a_i8 = _pad2(adj_f, n_pad, n_pad).astype(jnp.int8)                   # binary, exact

    h = _pad2(feat, n_pad, _round_up(feat.shape[1], _LANE)).astype(jnp.bfloat16)

    n_layers = len(params)
    for i, p in enumerate(params):
        last = i == n_layers - 1
        f_in_pad = h.shape[1]
        f_pad = _round_up(p["w"].shape[1], _LANE)

        w = _pad2(p["w"], f_in_pad, f_pad)
        if use_linear:
            w_cat = jnp.concatenate([w, _pad2(p["w_lin"], f_in_pad, f_pad)], axis=1)
            xw, lin = _transform(h, w_cat.astype(jnp.bfloat16), d_col, f_pad,
                                 use_linear=True, vmem_limit=vmem_limit)
        else:
            xw = _transform(h, w.astype(jnp.bfloat16), d_col, f_pad,
                            use_linear=False, vmem_limit=vmem_limit)
            lin = None

        bias = _pad2(p["bias"], 1, f_pad) if last else None
        scale = _pad2(p["scale"], 1, f_pad) if not last else None
        shift = _pad2(p["shift"], 1, f_pad) if not last else None

        tm, tk, xw_res = _choose_agg_tiles(n_pad, f_pad, budget, use_linear)

        h = _aggregate(a_i8, xw, d_col, lin, bias, scale, shift,
                       tm=tm, tk=tk, xw_resident=xw_res,
                       use_linear=use_linear, use_bias=last, bn_relu=not last,
                       out_dtype=jnp.float32 if last else jnp.bfloat16,
                       vmem_limit=vmem_limit)
        # dropout: identity in eval mode

    return h[:n, :n_classes]


# ----------------------------------------------------------------------------
# Parameters, pure-JAX reference, demo
# ----------------------------------------------------------------------------
def init_params(key, in_feats, n_hidden, n_classes, n_layers, eps=1e-5):
    """Synthetic parameters matching the module's __init__ (BN folded for eval)."""
    params = []
    for i in range(n_layers):
        f_in = in_feats if i == 0 else n_hidden
        f_out = n_classes if i == n_layers - 1 else n_hidden
        last = i == n_layers - 1
        key, k1, k2, k3, k4, k5, k6 = jax.random.split(key, 7)
        w = jax.random.normal(k1, (f_in, f_out), jnp.float32) / jnp.sqrt(f_in)
        w_lin = jax.random.normal(k2, (f_in, f_out), jnp.float32) / jnp.sqrt(f_in)
        bias = (0.1 * jax.random.normal(k3, (1, f_out), jnp.float32)
                if last else jnp.zeros((1, f_out), jnp.float32))
        if not last:
            gamma = 1.0 + 0.1 * jax.random.normal(k4, (1, f_out), jnp.float32)
            beta = 0.1 * jax.random.normal(k5, (1, f_out), jnp.float32)
            mean = 0.1 * jax.random.normal(k6, (1, f_out), jnp.float32)
            var = jnp.ones((1, f_out), jnp.float32)
            scale = gamma / jnp.sqrt(var + eps)
            shift = beta - mean * scale
        else:
            scale = jnp.ones((1, f_out), jnp.float32)
            shift = jnp.zeros((1, f_out), jnp.float32)
        params.append(dict(w=w, w_lin=w_lin, bias=bias, scale=scale, shift=shift))
    return params


def gcn_reference(adj, feat, params, *, use_linear=True):
    adj = adj.astype(jnp.float32)
    deg = jnp.maximum(adj.sum(axis=1), 1.0)
    d = 1.0 / jnp.sqrt(deg)
    a_norm = adj * d[:, None] * d[None, :]
    h = feat
    n_layers = len(params)
    for i, p in enumerate(params):
        last = i == n_layers - 1
        conv = a_norm @ (h @ p["w"])
        if last:
            conv = conv + p["bias"]
        if use_linear:
            conv = conv + h @ p["w_lin"]
        h = conv
        if not last:
            h = jnp.maximum(h * p["scale"] + p["shift"], 0.0)
    return h


if __name__ == "__main__":
    # Small synthetic graph / features (non-aligned sizes to exercise padding/tiling).
    N = 300
    in_feats = 48
    n_hidden = 64
    n_classes = 10
    n_layers = 3

    key = jax.random.PRNGKey(0)
    key, k_adj, k_feat = jax.random.split(key, 3)

    # Random undirected binary graph (GraphConv norm='both' normalization is done
    # inside gcn_forward / gcn_reference from the binary structure).
    adj = (jax.random.uniform(k_adj, (N, N)) < 0.05).astype(jnp.float32)
    adj = jnp.maximum(adj, adj.T)
    adj = adj * (1.0 - jnp.eye(N, dtype=jnp.float32))

    feat = jax.random.normal(k_feat, (N, in_feats), jnp.float32)
    params = init_params(key, in_feats, n_hidden, n_classes, n_layers)

    fwd = jax.jit(functools.partial(gcn_forward, use_linear=True))
    out = jax.block_until_ready(fwd(adj, feat, params))
    assert out.shape == (N, n_classes), out.shape

    # Loose check vs pure-JAX f32 reference (activations are bf16, accumulation f32).
    ref = gcn_reference(adj, feat, params, use_linear=True)
    err = float(jnp.max(jnp.abs(out - ref)))
    tol = 5e-2 * (float(jnp.max(jnp.abs(ref))) + 1.0)
    assert err < tol, (err, tol)

    print("KERNEL_OK")
</pallas_src>

<mosaic_0001>
module attributes {stable_mosaic.version = 11 : i64} {
  func.func @kernel(%arg0: i32, %arg1: memref<128x128xbf16, #tpu.memory_space<vmem>>, %arg2: memref<128x256xbf16, #tpu.memory_space<vmem>>, %arg3: memref<128x1xf32, #tpu.memory_space<vmem>>, %arg4: memref<128x128xbf16, #tpu.memory_space<vmem>>, %arg5: memref<128x128xbf16, #tpu.memory_space<vmem>>) attributes {dimension_semantics = [#tpu.dimension_semantics<parallel>], iteration_bounds = array<i64: 3>, scalar_prefetch = 0 : i64, scratch_operands = 0 : i64, tpu.core_type = #tpu.core_type<tc>, window_params = [{transform_indices = @transform_0, window_bounds = array<i64: 128, 128>}, {pipeline_mode = #tpu.pipeline_mode<synchronous>, transform_indices = @transform_1, window_bounds = array<i64: 128, 256>}, {transform_indices = @transform_2, window_bounds = array<i64: 128, 1>}, {transform_indices = @transform_3, window_bounds = array<i64: 128, 128>}, {transform_indices = @transform_4, window_bounds = array<i64: 128, 128>}]} {
    %c0 = arith.constant 0 : index
    %c0_0 = arith.constant 0 : index
    %0 = vector.load %arg1[%c0, %c0_0] : memref<128x128xbf16, #tpu.memory_space<vmem>>, vector<128x128xbf16>
    %c0_1 = arith.constant 0 : index
    %c0_2 = arith.constant 0 : index
    %1 = vector.load %arg2[%c0_1, %c0_2] : memref<128x256xbf16, #tpu.memory_space<vmem>>, vector<128x256xbf16>
    %cst = arith.constant dense<0.000000e+00> : vector<128x256xf32>
    %2 = tpu.matmul %0, %1, %cst {dimension_numbers = #tpu.dot_dimension_numbers<[1], [0], [0], [1], [0, 0, 1, 1], [], []>} : vector<128x128xbf16>, vector<128x256xbf16>, vector<128x256xf32> -> vector<128x256xf32>
    %3 = vector.extract_strided_slice %2 {offsets = [0, 0], sizes = [128, 128], strides = [1, 1]} : vector<128x256xf32> to vector<128x128xf32>
    %c0_3 = arith.constant 0 : index
    %c0_4 = arith.constant 0 : index
    %4 = vector.load %arg3[%c0_3, %c0_4] : memref<128x1xf32, #tpu.memory_space<vmem>>, vector<128x1xf32>
    %5 = vector.broadcast %4 : vector<128x1xf32> to vector<128x128xf32>
    %6 = arith.mulf %3, %5 : vector<128x128xf32>
    %7 = arith.truncf %6 : vector<128x128xf32> to vector<128x128xbf16>
    %c0_5 = arith.constant 0 : index
    %c0_6 = arith.constant 0 : index
    %8 = vector.load %arg4[%c0_5, %c0_6] : memref<128x128xbf16, #tpu.memory_space<vmem>>, vector<128x128xbf16>
    tpu.vector_store %arg4[%c0_5, %c0_6], %7 {strides = array<i32>} : memref<128x128xbf16, #tpu.memory_space<vmem>>, vector<128x128xbf16>,
    %9 = vector.extract_strided_slice %2 {offsets = [0, 128], sizes = [128, 128], strides = [1, 1]} : vector<128x256xf32> to vector<128x128xf32>
    %10 = arith.truncf %9 : vector<128x128xf32> to vector<128x128xbf16>
    %c0_7 = arith.constant 0 : index
    %c0_8 = arith.constant 0 : index
    %11 = vector.load %arg5[%c0_7, %c0_8] : memref<128x128xbf16, #tpu.memory_space<vmem>>, vector<128x128xbf16>
    tpu.vector_store %arg5[%c0_7, %c0_8], %10 {strides = array<i32>} : memref<128x128xbf16, #tpu.memory_space<vmem>>, vector<128x128xbf16>,
    return
  }
  func.func @transform_0(%arg0: i32) -> (i32, i32) {
    %c0_i32 = arith.constant 0 : i32
    %c0_i32_0 = arith.constant 0 : i32
    return %arg0, %c0_i32 : i32, i32
  }
  func.func @transform_1(%arg0: i32) -> (i32, i32) {
    %c0_i32 = arith.constant 0 : i32
    %c0_i32_0 = arith.constant 0 : i32
    %c0_i32_1 = arith.constant 0 : i32
    return %c0_i32, %c0_i32_0 : i32, i32
  }
  func.func @transform_2(%arg0: i32) -> (i32, i32) {
    %c0_i32 = arith.constant 0 : i32
    %c0_i32_0 = arith.constant 0 : i32
    return %arg0, %c0_i32 : i32, i32
  }
  func.func @transform_3(%arg0: i32) -> (i32, i32) {
    %c0_i32 = arith.constant 0 : i32
    %c0_i32_0 = arith.constant 0 : i32
    return %arg0, %c0_i32 : i32, i32
  }
  func.func @transform_4(%arg0: i32) -> (i32, i32) {
    %c0_i32 = arith.constant 0 : i32
    %c0_i32_0 = arith.constant 0 : i32
    return %arg0, %c0_i32 : i32, i32
  }
}

module attributes {stable_mosaic.version = 11 : i64} {
  func.func @kernel(%arg0: i32, %arg1: i32, %arg2: memref<128x128xi8, #tpu.memory_space<vmem>>, %arg3: memref<384x128xbf16, #tpu.memory_space<vmem>>, %arg4: memref<128x1xf32, #tpu.memory_space<vmem>>, %arg5: memref<128x128xbf16, #tpu.memory_space<vmem>>, %arg6: memref<1x128xf32, #tpu.memory_space<vmem>>, %arg7: memref<1x128xf32, #tpu.memory_space<vmem>>, %arg8: memref<128x128xbf16, #tpu.memory_space<vmem>>, %arg9: memref<128x128xf32, #tpu.memory_space<vmem>>) attributes {dimension_semantics = [#tpu.dimension_semantics<parallel>, #tpu.dimension_semantics<arbitrary>], iteration_bounds = array<i64: 3, 3>, scalar_prefetch = 0 : i64, scratch_operands = 1 : i64, tpu.core_type = #tpu.core_type<tc>, window_params = [{transform_indices = @transform_0, window_bounds = array<i64: 128, 128>}, {pipeline_mode = #tpu.pipeline_mode<synchronous>, transform_indices = @transform_1, window_bounds = array<i64: 384, 128>}, {transform_indices = @transform_2, window_bounds = array<i64: 128, 1>}, {transform_indices = @transform_3, window_bounds = array<i64: 128, 128>}, {pipeline_mode = #tpu.pipeline_mode<synchronous>, transform_indices = @transform_4, window_bounds = array<i64: 1, 128>}, {pipeline_mode = #tpu.pipeline_mode<synchronous>, transform_indices = @transform_5, window_bounds = array<i64: 1, 128>}, {transform_indices = @transform_6, window_bounds = array<i64: 128, 128>}]} {
    %c128_i32 = arith.constant 128 : i32
    %0 = arith.muli %arg1, %c128_i32 : i32
    %1 = tpu.assume_multiple %0, 128 : i32
    %2 = arith.index_cast %1 : i32 to index
    %c0 = arith.constant 0 : index
    %3 = vector.load %arg3[%2, %c0] : memref<384x128xbf16, #tpu.memory_space<vmem>>, vector<128x128xbf16>
    %c0_0 = arith.constant 0 : index
    %c0_1 = arith.constant 0 : index
    %4 = vector.load %arg2[%c0_0, %c0_1] : memref<128x128xi8, #tpu.memory_space<vmem>>, vector<128x128xi8>
    %5 = arith.sitofp %4 : vector<128x128xi8> to vector<128x128xbf16>
    %cst = arith.constant dense<0.000000e+00> : vector<128x128xf32>
    %6 = tpu.matmul %5, %3, %cst {dimension_numbers = #tpu.dot_dimension_numbers<[1], [0], [0], [1], [0, 0, 1, 1], [], []>} : vector<128x128xbf16>, vector<128x128xbf16>, vector<128x128xf32> -> vector<128x128xf32>
    %c0_i32 = arith.constant 0 : i32
    %7 = arith.cmpi eq, %arg1, %c0_i32 : i32
    %8 = arith.extui %7 : i1 to i32
    %c0_i32_2 = arith.constant 0 : i32
    %9 = arith.cmpi ne, %8, %c0_i32_2 : i32
    scf.if %9 {
      %c0_6 = arith.constant 0 : index
      %c0_7 = arith.constant 0 : index
      %16 = vector.load %arg9[%c0_6, %c0_7] : memref<128x128xf32, #tpu.memory_space<vmem>>, vector<128x128xf32>
      tpu.vector_store %arg9[%c0_6, %c0_7], %6 {strides = array<i32>} : memref<128x128xf32, #tpu.memory_space<vmem>>, vector<128x128xf32>,
    } else {
    }
    %c0_i32_3 = arith.constant 0 : i32
    %10 = arith.cmpi ne, %arg1, %c0_i32_3 : i32
    %11 = arith.extui %10 : i1 to i32
    %c0_i32_4 = arith.constant 0 : i32
    %12 = arith.cmpi ne, %11, %c0_i32_4 : i32
    scf.if %12 {
      %c0_6 = arith.constant 0 : index
      %c0_7 = arith.constant 0 : index
      %16 = vector.load %arg9[%c0_6, %c0_7] : memref<128x128xf32, #tpu.memory_space<vmem>>, vector<128x128xf32>
      %17 = arith.addf %16, %6 : vector<128x128xf32>
      %c0_8 = arith.constant 0 : index
      %c0_9 = arith.constant 0 : index
      %18 = vector.load %arg9[%c0_8, %c0_9] : memref<128x128xf32, #tpu.memory_space<vmem>>, vector<128x128xf32>
      tpu.vector_store %arg9[%c0_8, %c0_9], %17 {strides = array<i32>} : memref<128x128xf32, #tpu.memory_space<vmem>>, vector<128x128xf32>,
    } else {
    }
    %c2_i32 = arith.constant 2 : i32
    %13 = arith.cmpi eq, %arg1, %c2_i32 : i32
    %14 = arith.extui %13 : i1 to i32
    %c0_i32_5 = arith.constant 0 : i32
    %15 = arith.cmpi ne, %14, %c0_i32_5 : i32
    scf.if %15 {
      %c0_6 = arith.constant 0 : index
      %c0_7 = arith.constant 0 : index
      %16 = vector.load %arg9[%c0_6, %c0_7] : memref<128x128xf32, #tpu.memory_space<vmem>>, vector<128x128xf32>
      %c0_8 = arith.constant 0 : index
      %c0_9 = arith.constant 0 : index
      %17 = vector.load %arg4[%c0_8, %c0_9] : memref<128x1xf32, #tpu.memory_space<vmem>>, vector<128x1xf32>
      %18 = vector.broadcast %17 : vector<128x1xf32> to vector<128x128xf32>
      %19 = arith.mulf %16, %18 : vector<128x128xf32>
      %c0_10 = arith.constant 0 : index
      %c0_11 = arith.constant 0 : index
      %20 = vector.load %arg5[%c0_10, %c0_11] : memref<128x128xbf16, #tpu.memory_space<vmem>>, vector<128x128xbf16>
      %21 = arith.extf %20 : vector<128x128xbf16> to vector<128x128xf32>
      %22 = arith.addf %19, %21 : vector<128x128xf32>
      %c0_12 = arith.constant 0 : index
      %c0_13 = arith.constant 0 : index
      %23 = vector.load %arg6[%c0_12, %c0_13] : memref<1x128xf32, #tpu.memory_space<vmem>>, vector<1x128xf32>
      %24 = vector.broadcast %23 : vector<1x128xf32> to vector<128x128xf32>
      %25 = arith.mulf %22, %24 : vector<128x128xf32>
      %c0_14 = arith.constant 0 : index
      %c0_15 = arith.constant 0 : index
      %26 = vector.load %arg7[%c0_14, %c0_15] : memref<1x128xf32, #tpu.memory_space<vmem>>, vector<1x128xf32>
      %27 = vector.broadcast %26 : vector<1x128xf32> to vector<128x128xf32>
      %28 = arith.addf %25, %27 : vector<128x128xf32>
      %cst_16 = arith.constant 0.000000e+00 : f32
      %29 = vector.broadcast %cst_16 : f32 to vector<128x128xf32>
      %30 = arith.maximumf %28, %29 : vector<128x128xf32>
      %31 = arith.truncf %30 : vector<128x128xf32> to vector<128x128xbf16>
      %c0_17 = arith.constant 0 : index
      %c0_18 = arith.constant 0 : index
      %32 = vector.load %arg8[%c0_17, %c0_18] : memref<128x128xbf16, #tpu.memory_space<vmem>>, vector<128x128xbf16>
      tpu.vector_store %arg8[%c0_17, %c0_18], %31 {strides = array<i32>} : memref<128x128xbf16, #tpu.memory_space<vmem>>, vector<128x128xbf16>,
    } else {
    }
    return
  }
  func.func @transform_0(%arg0: i32, %arg1: i32) -> (i32, i32) {
    %c0_i32 = arith.constant 0 : i32
    return %arg0, %arg1 : i32, i32
  }
  func.func @transform_1(%arg0: i32, %arg1: i32) -> (i32, i32) {
    %c0_i32 = arith.constant 0 : i32
    %c0_i32_0 = arith.constant 0 : i32
    %c0_i32_1 = arith.constant 0 : i32
    return %c0_i32, %c0_i32_0 : i32, i32
  }
  func.func @transform_2(%arg0: i32, %arg1: i32) -> (i32, i32) {
    %c0_i32 = arith.constant 0 : i32
    %c0_i32_0 = arith.constant 0 : i32
    return %arg0, %c0_i32 : i32, i32
  }
  func.func @transform_3(%arg0: i32, %arg1: i32) -> (i32, i32) {
    %c0_i32 = arith.constant 0 : i32
    %c0_i32_0 = arith.constant 0 : i32
    return %arg0, %c0_i32 : i32, i32
  }
  func.func @transform_4(%arg0: i32, %arg1: i32) -> (i32, i32) {
    %c0_i32 = arith.constant 0 : i32
    %c0_i32_0 = arith.constant 0 : i32
    %c0_i32_1 = arith.constant 0 : i32
    return %c0_i32, %c0_i32_0 : i32, i32
  }
  func.func @transform_5(%arg0: i32, %arg1: i32) -> (i32, i32) {
    %c0_i32 = arith.constant 0 : i32
    %c0_i32_0 = arith.constant 0 : i32
    %c0_i32_1 = arith.constant 0 : i32
    return %c0_i32, %c0_i32_0 : i32, i32
  }
  func.func @transform_6(%arg0: i32, %arg1: i32) -> (i32, i32) {
    %c0_i32 = arith.constant 0 : i32
    %c0_i32_0 = arith.constant 0 : i32
    return %arg0, %c0_i32 : i32, i32
  }
}

module attributes {stable_mosaic.version = 11 : i64} {
  func.func @kernel(%arg0: i32, %arg1: i32, %arg2: memref<128x128xi8, #tpu.memory_space<vmem>>, %arg3: memref<384x128xbf16, #tpu.memory_space<vmem>>, %arg4: memref<128x1xf32, #tpu.memory_space<vmem>>, %arg5: memref<128x128xbf16, #tpu.memory_space<vmem>>, %arg6: memref<1x128xf32, #tpu.memory_space<vmem>>, %arg7: memref<128x128xf32, #tpu.memory_space<vmem>>, %arg8: memref<128x128xf32, #tpu.memory_space<vmem>>) attributes {dimension_semantics = [#tpu.dimension_semantics<parallel>, #tpu.dimension_semantics<arbitrary>], iteration_bounds = array<i64: 3, 3>, scalar_prefetch = 0 : i64, scratch_operands = 1 : i64, tpu.core_type = #tpu.core_type<tc>, window_params = [{transform_indices = @transform_0, window_bounds = array<i64: 128, 128>}, {pipeline_mode = #tpu.pipeline_mode<synchronous>, transform_indices = @transform_1, window_bounds = array<i64: 384, 128>}, {transform_indices = @transform_2, window_bounds = array<i64: 128, 1>}, {transform_indices = @transform_3, window_bounds = array<i64: 128, 128>}, {pipeline_mode = #tpu.pipeline_mode<synchronous>, transform_indices = @transform_4, window_bounds = array<i64: 1, 128>}, {transform_indices = @transform_5, window_bounds = array<i64: 128, 128>}]} {
    %c128_i32 = arith.constant 128 : i32
    %0 = arith.muli %arg1, %c128_i32 : i32
    %1 = tpu.assume_multiple %0, 128 : i32
    %2 = arith.index_cast %1 : i32 to index
    %c0 = arith.constant 0 : index
    %3 = vector.load %arg3[%2, %c0] : memref<384x128xbf16, #tpu.memory_space<vmem>>, vector<128x128xbf16>
    %c0_0 = arith.constant 0 : index
    %c0_1 = arith.constant 0 : index
    %4 = vector.load %arg2[%c0_0, %c0_1] : memref<128x128xi8, #tpu.memory_space<vmem>>, vector<128x128xi8>
    %5 = arith.sitofp %4 : vector<128x128xi8> to vector<128x128xbf16>
    %cst = arith.constant dense<0.000000e+00> : vector<128x128xf32>
    %6 = tpu.matmul %5, %3, %cst {dimension_numbers = #tpu.dot_dimension_numbers<[1], [0], [0], [1], [0, 0, 1, 1], [], []>} : vector<128x128xbf16>, vector<128x128xbf16>, vector<128x128xf32> -> vector<128x128xf32>
    %c0_i32 = arith.constant 0 : i32
    %7 = arith.cmpi eq, %arg1, %c0_i32 : i32
    %8 = arith.extui %7 : i1 to i32
    %c0_i32_2 = arith.constant 0 : i32
    %9 = arith.cmpi ne, %8, %c0_i32_2 : i32
    scf.if %9 {
      %c0_6 = arith.constant 0 : index
      %c0_7 = arith.constant 0 : index
      %16 = vector.load %arg8[%c0_6, %c0_7] : memref<128x128xf32, #tpu.memory_space<vmem>>, vector<128x128xf32>
      tpu.vector_store %arg8[%c0_6, %c0_7], %6 {strides = array<i32>} : memref<128x128xf32, #tpu.memory_space<vmem>>, vector<128x128xf32>,
    } else {
    }
    %c0_i32_3 = arith.constant 0 : i32
    %10 = arith.cmpi ne, %arg1, %c0_i32_3 : i32
    %11 = arith.extui %10 : i1 to i32
    %c0_i32_4 = arith.constant 0 : i32
    %12 = arith.cmpi ne, %11, %c0_i32_4 : i32
    scf.if %12 {
      %c0_6 = arith.constant 0 : index
      %c0_7 = arith.constant 0 : index
      %16 = vector.load %arg8[%c0_6, %c0_7] : memref<128x128xf32, #tpu.memory_space<vmem>>, vector<128x128xf32>
      %17 = arith.addf %16, %6 : vector<128x128xf32>
      %c0_8 = arith.constant 0 : index
      %c0_9 = arith.constant 0 : index
      %18 = vector.load %arg8[%c0_8, %c0_9] : memref<128x128xf32, #tpu.memory_space<vmem>>, vector<128x128xf32>
      tpu.vector_store %arg8[%c0_8, %c0_9], %17 {strides = array<i32>} : memref<128x128xf32, #tpu.memory_space<vmem>>, vector<128x128xf32>,
    } else {
    }
    %c2_i32 = arith.constant 2 : i32
    %13 = arith.cmpi eq, %arg1, %c2_i32 : i32
    %14 = arith.extui %13 : i1 to i32
    %c0_i32_5 = arith.constant 0 : i32
    %15 = arith.cmpi ne, %14, %c0_i32_5 : i32
    scf.if %15 {
      %c0_6 = arith.constant 0 : index
      %c0_7 = arith.constant 0 : index
      %16 = vector.load %arg8[%c0_6, %c0_7] : memref<128x128xf32, #tpu.memory_space<vmem>>, vector<128x128xf32>
      %c0_8 = arith.constant 0 : index
      %c0_9 = arith.constant 0 : index
      %17 = vector.load %arg4[%c0_8, %c0_9] : memref<128x1xf32, #tpu.memory_space<vmem>>, vector<128x1xf32>
      %18 = vector.broadcast %17 : vector<128x1xf32> to vector<128x128xf32>
      %19 = arith.mulf %16, %18 : vector<128x128xf32>
      %c0_10 = arith.constant 0 : index
      %c0_11 = arith.constant 0 : index
      %20 = vector.load %arg5[%c0_10, %c0_11] : memref<128x128xbf16, #tpu.memory_space<vmem>>, vector<128x128xbf16>
      %21 = arith.extf %20 : vector<128x128xbf16> to vector<128x128xf32>
      %22 = arith.addf %19, %21 : vector<128x128xf32>
      %c0_12 = arith.constant 0 : index
      %c0_13 = arith.constant 0 : index
      %23 = vector.load %arg6[%c0_12, %c0_13] : memref<1x128xf32, #tpu.memory_space<vmem>>, vector<1x128xf32>
      %24 = vector.broadcast %23 : vector<1x128xf32> to vector<128x128xf32>
      %25 = arith.addf %22, %24 : vector<128x128xf32>
      %c0_14 = arith.constant 0 : index
      %c0_15 = arith.constant 0 : index
      %26 = vector.load %arg7[%c0_14, %c0_15] : memref<128x128xf32, #tpu.memory_space<vmem>>, vector<128x128xf32>
      tpu.vector_store %arg7[%c0_14, %c0_15], %25 {strides = array<i32>} : memref<128x128xf32, #tpu.memory_space<vmem>>, vector<128x128xf32>,
    } else {
    }
    return
  }
  func.func @transform_0(%arg0: i32, %arg1: i32) -> (i32, i32) {
    %c0_i32 = arith.constant 0 : i32
    return %arg0, %arg1 : i32, i32
  }
  func.func @transform_1(%arg0: i32, %arg1: i32) -> (i32, i32) {
    %c0_i32 = arith.constant 0 : i32
    %c0_i32_0 = arith.constant 0 : i32
    %c0_i32_1 = arith.constant 0 : i32
    return %c0_i32, %c0_i32_0 : i32, i32
  }
  func.func @transform_2(%arg0: i32, %arg1: i32) -> (i32, i32) {
    %c0_i32 = arith.constant 0 : i32
    %c0_i32_0 = arith.constant 0 : i32
    return %arg0, %c0_i32 : i32, i32
  }
  func.func @transform_3(%arg0: i32, %arg1: i32) -> (i32, i32) {
    %c0_i32 = arith.constant 0 : i32
    %c0_i32_0 = arith.constant 0 : i32
    return %arg0, %c0_i32 : i32, i32
  }
  func.func @transform_4(%arg0: i32, %arg1: i32) -> (i32, i32) {
    %c0_i32 = arith.constant 0 : i32
    %c0_i32_0 = arith.constant 0 : i32
    %c0_i32_1 = arith.constant 0 : i32
    return %c0_i32, %c0_i32_0 : i32, i32
  }
  func.func @transform_5(%arg0: i32, %arg1: i32) -> (i32, i32) {
    %c0_i32 = arith.constant 0 : i32
    %c0_i32_0 = arith.constant 0 : i32
    return %arg0, %c0_i32 : i32, i32
  }
}

</mosaic_0001>

<llo_original>
// kernel: gcn_forward.6
$region0: #{gcn_forward.6}
  #allocation0 [shape = 'u32[]', space=smem, size = 0x4, offset = 0x4, fixed_abs, tag = 'smem constant byte address 0x4 - core index']
  #allocation1 [shape = 'u32[144,128]{1,0:T(1,128)}', space=vmem, size = 0x12000, scoped, tag = 'internal scratch']
  %s0 = inlined_call_operand.vmem [shape: bf16[384,128], index: 0, kind: input, shape index: {}]
  %s1 = inlined_call_operand.vmem [shape: bf16[128,256], index: 1, kind: input, shape index: {}]
  %s2 = inlined_call_operand.vmem [shape: f32[384,1], index: 2, kind: input, shape index: {}]
  %s3 = inlined_call_operand.vmem [shape: bf16[384,128], index: 3, kind: output, shape index: {0}]
  %s4 = inlined_call_operand.vmem [shape: bf16[384,128], index: 4, kind: output, shape index: {1}]
  %5 = xla_tuple %s3, %s4
  %s6 = sld [smem:[#allocation0]]
  $region53: #{gcn_forward.6} parent=0
    _
  %s8 = ssub.s32 1, %s6
  %s9 = scalar_select 0, %s8, %s6
  loop: start=0, step=1, limit=5
  $region2: #{gcn_forward.6} parent=0 // loop_pre_header
    _
  $region3: #{gcn_forward.6} parent=0 // loop_header
    %s11 = sphi 0, %s15
    %p12 = scmp.ge.s32.totalorder %s11, 5
    %s21 = sphi 0, %s23
    %s24 = sphi 0, %s21
    %s25 = sphi 0, %s24
    %s41 = sphi 0, %s25
    %s45 = sphi 0, %s45
    %s47 = sphi 0, %s45
    %s48 = sphi 0, %s47
    %s62 = sphi 0, %s48
    %s68 = sphi 0, %s70
    %s71 = sphi 0, %s68
    %s72 = sphi 0, %s71
    %s88 = sphi 0, %s72
    %s94 = sphi 0, %s96
    %s97 = sphi 0, %s94
    %s98 = sphi 0, %s97
    %s114 = sphi 0, %s98
    %s120 = sphi 0, %s122
    %s123 = sphi 0, %s120
    %s124 = sphi 0, %s123
    %s140 = sphi 0, %s124
  $region4: #{gcn_forward.6} parent=0 // loop_header_branch
    %14 = sbr.rel (%p12) target = $region8
  $region5: #{gcn_forward.6} parent=0 // loop_body
    %s16 = ssub.s32 %s11, 1
    %s17 = ssub.s32 %s11, 2
    %s18 = sadd.s32 %s11, 1
    %s19 = ssub.s32 %s11, %s18
    %p20 = scmp.eq.s32.totalorder %s19, 0
    %s22 = sadd.s32 %s21, 1
    %s23 = scalar_select %p20, %s21, %s22
    %p26 = pneg %p20
    %p27 = scmp.eq.s32.totalorder %s11, 2
    %p28 = por %p26, %p27
    %p29 = scmp.ne.s32.totalorder %s21, %s24
    %p30 = scmp.eq.s32.totalorder %s11, 0
    %p31 = por %p29, %p30
    %p32 = scmp.ne.s32.totalorder %s21, %s24
    %p33 = scmp.eq.s32.totalorder %s16, 2
    %p34 = por %p32, %p33
    %p35 = scmp.ne.s32.totalorder %s24, %s25
    %p36 = scmp.eq.s32.totalorder %s16, 0
    %p37 = por %p35, %p36
    %p38 = scmp.ne.s32.totalorder %s24, %s25
    %p39 = scmp.eq.s32.totalorder %s17, 2
    %p40 = por %p38, %p39
    %p42 = scmp.ne.s32.totalorder %s25, %s41
    %p43 = scmp.eq.s32.totalorder %s17, 0
    %p44 = por %p42, %p43
    %s46 = sadd.s32 %s45, 1
    %p49 = scmp.eq.s32.totalorder %s11, 2
    %p50 = scmp.ne.s32.totalorder %s45, %s47
    %p51 = scmp.eq.s32.totalorder %s11, 0
    %p52 = por %p50, %p51
    %p53 = scmp.ne.s32.totalorder %s45, %s47
    %p54 = scmp.eq.s32.totalorder %s16, 2
    %p55 = por %p53, %p54
    %p56 = scmp.ne.s32.totalorder %s47, %s48
    %p57 = scmp.eq.s32.totalorder %s16, 0
    %p58 = por %p56, %p57
    %p59 = scmp.ne.s32.totalorder %s47, %s48
    %p60 = scmp.eq.s32.totalorder %s17, 2
    %p61 = por %p59, %p60
    %p63 = scmp.ne.s32.totalorder %s48, %s62
    %p64 = scmp.eq.s32.totalorder %s17, 0
    %p65 = por %p63, %p64
    %s66 = ssub.s32 %s11, %s18
    %p67 = scmp.eq.s32.totalorder %s66, 0
    %s69 = sadd.s32 %s68, 1
    %s70 = scalar_select %p67, %s68, %s69
    %p73 = pneg %p67
    %p74 = scmp.eq.s32.totalorder %s11, 2
    %p75 = por %p73, %p74
    %p76 = scmp.ne.s32.totalorder %s68, %s71
    %p77 = scmp.eq.s32.totalorder %s11, 0
    %p78 = por %p76, %p77
    %p79 = scmp.ne.s32.totalorder %s68, %s71
    %p80 = scmp.eq.s32.totalorder %s16, 2
    %p81 = por %p79, %p80
    %p82 = scmp.ne.s32.totalorder %s71, %s72
    %p83 = scmp.eq.s32.totalorder %s16, 0
    %p84 = por %p82, %p83
    %p85 = scmp.ne.s32.totalorder %s71, %s72
    %p86 = scmp.eq.s32.totalorder %s17, 2
    %p87 = por %p85, %p86
    %p89 = scmp.ne.s32.totalorder %s72, %s88
    %p90 = scmp.eq.s32.totalorder %s17, 0
    %p91 = por %p89, %p90
    %s92 = ssub.s32 %s11, %s18
    %p93 = scmp.eq.s32.totalorder %s92, 0
    %s95 = sadd.s32 %s94, 1
    %s96 = scalar_select %p93, %s94, %s95
    %p99 = pneg %p93
    %p100 = scmp.eq.s32.totalorder %s11, 2
    %p101 = por %p99, %p100
    %p102 = scmp.ne.s32.totalorder %s94, %s97
    %p103 = scmp.eq.s32.totalorder %s11, 0
    %p104 = por %p102, %p103
    %p105 = scmp.ne.s32.totalorder %s94, %s97
    %p106 = scmp.eq.s32.totalorder %s16, 2
    %p107 = por %p105, %p106
    %p108 = scmp.ne.s32.totalorder %s97, %s98
    %p109 = scmp.eq.s32.totalorder %s16, 0
    %p110 = por %p108, %p109
    %p111 = scmp.ne.s32.totalorder %s97, %s98
    %p112 = scmp.eq.s32.totalorder %s17, 2
    %p113 = por %p111, %p112
    %p115 = scmp.ne.s32.totalorder %s98, %s114
    %p116 = scmp.eq.s32.totalorder %s17, 0
    %p117 = por %p115, %p116
    %s118 = ssub.s32 %s11, %s18
    %p119 = scmp.eq.s32.totalorder %s118, 0
    %s121 = sadd.s32 %s120, 1
    %s122 = scalar_select %p119, %s120, %s121
    %p125 = pneg %p119
    %p126 = scmp.eq.s32.totalorder %s11, 2
    %p127 = por %p125, %p126
    %p128 = scmp.ne.s32.totalorder %s120, %s123
    %p129 = scmp.eq.s32.totalorder %s11, 0
    %p130 = por %p128, %p129
    %p131 = scmp.ne.s32.totalorder %s120, %s123
    %p132 = scmp.eq.s32.totalorder %s16, 2
    %p133 = por %p131, %p132
    %p134 = scmp.ne.s32.totalorder %s123, %s124
    %p135 = scmp.eq.s32.totalorder %s16, 0
    %p136 = por %p134, %p135
    %p137 = scmp.ne.s32.totalorder %s123, %s124
    %p138 = scmp.eq.s32.totalorder %s17, 2
    %p139 = por %p137, %p138
    %p141 = scmp.ne.s32.totalorder %s124, %s140
    %p142 = scmp.eq.s32.totalorder %s17, 0
    %p143 = por %p141, %p142
    %p144 = scmp.le.s32.totalorder 1, %s11
    %p145 = scmp.lt.s32.totalorder %s11, 4
    %p146 = pnand %p144, %p145
    %p147 = pneg %p146
    // Predicated region
    $region9: #{gcn_forward.6} parent=5 // pred_check
      _
    $region10: #{gcn_forward.6} parent=5 // pred_check_branch
      %149 = sbr.rel (%p146) target = $region12
    $region11: #{gcn_forward.6} parent=5 // pred_region
      %s150 = ssub.s32 %s11, 1
      // Predicated region
      $region13: #{gcn_forward.6} parent=11 // pred_check
        %p151 = pneg %p58
      $region14: #{gcn_forward.6} parent=11 // pred_check_branch
        %153 = sbr.rel (%p151) target = $region16
      $region15: #{gcn_forward.6} parent=11 // pred_region
        _
      $region16: #{gcn_forward.6} parent=11 // pred_fallthru
        _
    $region12: #{gcn_forward.6} parent=5 // pred_fallthru
      _
    %p154 = scmp.lt.s32.totalorder %s11, 3
    // Predicated region
    $region17: #{gcn_forward.6} parent=5 // pred_check
      %p155 = pneg %p154
    $region18: #{gcn_forward.6} parent=5 // pred_check_branch
      %157 = sbr.rel (%p155) target = $region20
    $region19: #{gcn_forward.6} parent=5 // pred_region
      // Predicated region
      $region21: #{gcn_forward.6} parent=19 // pred_check
        %p158 = pneg %p31
      $region22: #{gcn_forward.6} parent=19 // pred_check_branch
        %160 = sbr.rel (%p158) target = $region24
      $region23: #{gcn_forward.6} parent=19 // pred_region
        %s161 = smul.u32 16, %s11
        %p162 = scmp.lt.s32.totalorder %s161, 47
        %s163 = scalar_select %p162, %s161, 47
        %s164 = smul.addr %s163, 4
        %s165 = scalar_lea.vmem %s0, %s164
        %s166 = smul.u32 16, %s11
      $region24: #{gcn_forward.6} parent=19 // pred_fallthru
        _
      // Predicated region
      $region25: #{gcn_forward.6} parent=19 // pred_check
        %p167 = pneg %p78
      $region26: #{gcn_forward.6} parent=19 // pred_check_branch
        %169 = sbr.rel (%p167) target = $region28
      $region27: #{gcn_forward.6} parent=19 // pred_region
        %s170 = smul.u32 16, %s11
        %p171 = scmp.lt.s32.totalorder %s170, 47
        %s172 = scalar_select %p171, %s170, 47
        %s173 = smul.addr %s172, 8
        %s174 = scalar_lea.vmem %s2, %s173
        %s175 = smul.u32 16, %s11
      $region28: #{gcn_forward.6} parent=19 // pred_fallthru
        _
    $region20: #{gcn_forward.6} parent=5 // pred_fallthru
      _
    %p176 = scmp.le.s32.totalorder 1, %s11
    %p177 = scmp.lt.s32.totalorder %s11, 4
    %p178 = pnand %p176, %p177
    %p179 = pneg %p178
    // Predicated region
    $region29: #{gcn_forward.6} parent=5 // pred_check
      _
    $region30: #{gcn_forward.6} parent=5 // pred_check_branch
      %181 = sbr.rel (%p178) target = $region32
    $region31: #{gcn_forward.6} parent=5 // pred_region
      %s182 = ssub.s32 %s11, 1
      %s183 = smul.u32 16, %s16
      %p184 = scmp.lt.s32.totalorder %s183, 47
      %s185 = scalar_select %p184, %s183, 47
      %s186 = smul.addr %s185, 4
      %s187 = scalar_lea.vmem %s0, %s186
      %p188 = pneg %p37
      %p189 = pneg %p34
      %p190 = pneg %p58
      %p191 = pneg %p55
      %s192 = smul.u32 16, %s16
      %p193 = scmp.lt.s32.totalorder %s192, 47
      %s194 = scalar_select %p193, %s192, 47
      %s195 = smul.addr %s194, 8
      %s196 = scalar_lea.vmem %s2, %s195
      %p197 = pneg %p84
      %p198 = pneg %p81
      %p199 = pneg %p110
      %p200 = pneg %p107
      %s201 = smul.u32 16, %s16
      %p202 = scmp.lt.s32.totalorder %s201, 47
      %s203 = scalar_select %p202, %s201, 47
      %s204 = smul.addr %s203, 4
      %s205 = scalar_lea.vmem %s3, %s204
      %p206 = pneg %p136
      %p207 = pneg %p133
      %s208 = smul.u32 16, %s16
      %p209 = scmp.lt.s32.totalorder %s208, 47
      %s210 = scalar_select %p209, %s208, 47
      %s211 = smul.addr %s210, 4
      %s212 = scalar_lea.vmem %s4, %s211
      %s213 = smul.u32 16, %s16
      %p214 = scmp.lt.s32.totalorder %s213, 47
      %s215 = scalar_select %p214, %s213, 47
      %s216 = smul.addr %s215, 4
      %s217 = scalar_lea.vmem %s0, %s216
      %s218 = smul.u32 16, %s16
      %s219 = smul.u32 16, %s16
      %p220 = scmp.lt.s32.totalorder %s219, 47
      %s221 = scalar_select %p220, %s219, 47
      %s222 = smul.addr %s221, 8
      %s223 = scalar_lea.vmem %s2, %s222
      %s224 = smul.u32 16, %s16
      %s225 = smul.u32 16, %s16
      %p226 = scmp.lt.s32.totalorder %s225, 47
      %s227 = scalar_select %p226, %s225, 47
      %s228 = smul.addr %s227, 4
      %s229 = scalar_lea.vmem %s3, %s228
      %s230 = smul.u32 16, %s16
      %s231 = smul.u32 16, %s16
      %p232 = scmp.lt.s32.totalorder %s231, 47
      %s233 = scalar_select %p232, %s231, 47
      %s234 = smul.addr %s233, 4
      %s235 = scalar_lea.vmem %s4, %s234
      %s236 = smul.u32 16, %s16
      %v238 = vld [vmem:[%s217] sm:$0xf]
      %v239 = vld [vmem:[%s217 + $0x4] sm:$0xf]
      %v240 = vld [vmem:[%s217 + $0x8] sm:$0xf]
      %v241 = vld [vmem:[%s217 + $0xc] sm:$0xf]
      %v242 = vld [vmem:[%s217 + $0x10] sm:$0xf]
      %v243 = vld [vmem:[%s217 + $0x14] sm:$0xf]
      %v244 = vld [vmem:[%s217 + $0x18] sm:$0xf]
      %v245 = vld [vmem:[%s217 + $0x1c] sm:$0xf]
      %v246 = vld [vmem:[%s217 + $0x20] sm:$0xf]
      %v247 = vld [vmem:[%s217 + $0x24] sm:$0xf]
      %v248 = vld [vmem:[%s217 + $0x28] sm:$0xf]
      %v249 = vld [vmem:[%s217 + $0x2c] sm:$0xf]
      %v250 = vld [vmem:[%s217 + $0x30] sm:$0xf]
      %v251 = vld [vmem:[%s217 + $0x34] sm:$0xf]
      %v252 = vld [vmem:[%s217 + $0x38] sm:$0xf]
      %v253 = vld [vmem:[%s217 + $0x3c] sm:$0xf]
      %v254 = vld [vmem:[%s1] sm:$0xff]
      %v255 = vld [vmem:[%s1 + $0x8] sm:$0xff]
      %v256 = vld [vmem:[%s1 + $0x10] sm:$0xff]
      %v257 = vld [vmem:[%s1 + $0x18] sm:$0xff]
      %v258 = vld [vmem:[%s1 + $0x20] sm:$0xff]
      %v259 = vld [vmem:[%s1 + $0x28] sm:$0xff]
      %v260 = vld [vmem:[%s1 + $0x30] sm:$0xff]
      %v261 = vld [vmem:[%s1 + $0x38] sm:$0xff]
      %v262 = vld [vmem:[%s1 + $0x40] sm:$0xff]
      %v263 = vld [vmem:[%s1 + $0x48] sm:$0xff]
      %v264 = vld [vmem:[%s1 + $0x50] sm:$0xff]
      %v265 = vld [vmem:[%s1 + $0x58] sm:$0xff]
      %v266 = vld [vmem:[%s1 + $0x60] sm:$0xff]
      %v267 = vld [vmem:[%s1 + $0x68] sm:$0xff]
      %v268 = vld [vmem:[%s1 + $0x70] sm:$0xff]
      %v269 = vld [vmem:[%s1 + $0x78] sm:$0xff]
      %v286 = vunpack.c.l.b16 %v238
      %v287 = vunpack.c.l.b16 %v239
      %v288 = vunpack.c.l.b16 %v240
      %v289 = vunpack.c.l.b16 %v241
      %v290 = vunpack.c.l.b16 %v242
      %v291 = vunpack.c.l.b16 %v243
      %v292 = vunpack.c.l.b16 %v244
      %v293 = vunpack.c.l.b16 %v245
      %v294 = vunpack.c.l.b16 %v246
      %v295 = vunpack.c.l.b16 %v247
      %v296 = vunpack.c.l.b16 %v248
      %v297 = vunpack.c.l.b16 %v249
      %v298 = vunpack.c.l.b16 %v250
      %v299 = vunpack.c.l.b16 %v251
      %v300 = vunpack.c.l.b16 %v252
      %v301 = vunpack.c.l.b16 %v253
      %v302 = vpack.c.b16 %v287, %v286
      %v303 = vpack.c.b16 %v289, %v288
      %v304 = vpack.c.b16 %v291, %v290
      %v305 = vpack.c.b16 %v293, %v292
      %v306 = vpack.c.b16 %v295, %v294
      %v307 = vpack.c.b16 %v297, %v296
      %v308 = vpack.c.b16 %v299, %v298
      %v309 = vpack.c.b16 %v301, %v300
      %v334 = vunpack.c.l.b16 %v254
      %v335 = vunpack.c.h.b16 %v254
      %v336 = vunpack.c.l.b16 %v255
      %v337 = vunpack.c.h.b16 %v255
      %v338 = vunpack.c.l.b16 %v256
      %v339 = vunpack.c.h.b16 %v256
      %v340 = vunpack.c.l.b16 %v257
      %v341 = vunpack.c.h.b16 %v257
      %v342 = vunpack.c.l.b16 %v258
      %v343 = vunpack.c.h.b16 %v258
      %v344 = vunpack.c.l.b16 %v259
      %v345 = vunpack.c.h.b16 %v259
      %v346 = vunpack.c.l.b16 %v260
      %v347 = vunpack.c.h.b16 %v260
      %v348 = vunpack.c.l.b16 %v261
      %v349 = vunpack.c.h.b16 %v261
      %v350 = vunpack.c.l.b16 %v262
      %v351 = vunpack.c.h.b16 %v262
      %v352 = vunpack.c.l.b16 %v263
      %v353 = vunpack.c.h.b16 %v263
      %v354 = vunpack.c.l.b16 %v264
      %v355 = vunpack.c.h.b16 %v264
      %v356 = vunpack.c.l.b16 %v265
      %v357 = vunpack.c.h.b16 %v265
      %v358 = vunpack.c.l.b16 %v266
      %v359 = vunpack.c.h.b16 %v266
      %v360 = vunpack.c.l.b16 %v267
      %v361 = vunpack.c.h.b16 %v267
      %v362 = vunpack.c.l.b16 %v268
      %v363 = vunpack.c.h.b16 %v268
      %v364 = vunpack.c.l.b16 %v269
      %v365 = vunpack.c.h.b16 %v269
      %v366 = vpack.c.b16 %v336, %v334
      %v367 = vpack.c.b16 %v337, %v335
      %v368 = vpack.c.b16 %v340, %v338
      %v369 = vpack.c.b16 %v341, %v339
      %v370 = vpack.c.b16 %v344, %v342
      %v371 = vpack.c.b16 %v345, %v343
      %v372 = vpack.c.b16 %v348, %v346
      %v373 = vpack.c.b16 %v349, %v347
      %v374 = vpack.c.b16 %v352, %v350
      %v375 = vpack.c.b16 %v353, %v351
      %v376 = vpack.c.b16 %v356, %v354
      %v377 = vpack.c.b16 %v357, %v355
      %v378 = vpack.c.b16 %v360, %v358
      %v379 = vpack.c.b16 %v361, %v359
      %v380 = vpack.c.b16 %v364, %v362
      %v381 = vpack.c.b16 %v365, %v363
      %398 = vmatprep.subr.bf16.mxu0 %v367
      %399 = vmatpush1.bf16.msra.mxu0 %v366
      %400 = vmatprep.subr.bf16.mxu0 %v369
      %401 = vmatpush1.bf16.msra.mxu0 %v368
      %402 = vmatprep.subr.bf16.mxu0 %v371
      %403 = vmatpush1.bf16.msra.mxu0 %v370
      %404 = vmatprep.subr.bf16.mxu0 %v373
      %405 = vmatpush1.bf16.msra.mxu0 %v372
      %406 = vmatprep.subr.bf16.mxu0 %v375
      %407 = vmatpush1.bf16.msra.mxu0 %v374
      %408 = vmatprep.subr.bf16.mxu0 %v377
      %409 = vmatpush1.bf16.msra.mxu0 %v376
      %410 = vmatprep.subr.bf16.mxu0 %v379
      %411 = vmatpush1.bf16.msra.mxu0 %v378
      %412 = vmatprep.subr.bf16.mxu0 %v381
      %413 = vmatpush1.bf16.msra.mxu0 %v380
      %414 = vmatprep.subr.bf16.mxu0 0
      %415 = vmatpush1.bf16.msra.mxu0 0
      %416 = vmatprep.subr.bf16.mxu0 0
      %417 = vmatpush1.bf16.msra.mxu0 0
      %418 = vmatprep.subr.bf16.mxu0 0
      %419 = vmatpush1.bf16.msra.mxu0 0
      %420 = vmatprep.subr.bf16.mxu0 0
      %421 = vmatpush1.bf16.msra.mxu0 0
      %422 = vmatprep.subr.bf16.mxu0 0
      %423 = vmatpush1.bf16.msra.mxu0 0
      %424 = vmatprep.subr.bf16.mxu0 0
      %425 = vmatpush1.bf16.msra.mxu0 0
      %426 = vmatprep.subr.bf16.mxu0 0
      %427 = vmatpush1.bf16.msra.mxu0 0
      %428 = vmatprep.subr.bf16.mxu0 0
      %429 = vmatpush1.bf16.msra.mxu0 0
      %430 = vmatprep.mubr.bf16.mxu0 0
      %431 = vmatmul.mubr.bf16.gmra.mrb[0].mxu0 %v302
      %v432 = vpop.f32.mrb[0].mxu0
      %v433 = vadd.f32 0.0, %v432
      %v434 = vpop.f32.mrb[0].mxu0
      %v435 = vadd.f32 0.0, %v434
      %v436 = vpop.f32.mrb[0].mxu0
      %v437 = vadd.f32 0.0, %v436
      %v438 = vpop.f32.mrb[0].mxu0
      %v439 = vadd.f32 0.0, %v438
      %440 = vmatprep.mubr.bf16.mxu0 0
      %441 = vmatmul.mubr.bf16.gmra.mrb[0].mxu0 %v303
      %v442 = vpop.f32.mrb[0].mxu0
      %v443 = vadd.f32 0.0, %v442
      %v444 = vpop.f32.mrb[0].mxu0
      %v445 = vadd.f32 0.0, %v444
      %v446 = vpop.f32.mrb[0].mxu0
      %v447 = vadd.f32 0.0, %v446
      %v448 = vpop.f32.mrb[0].mxu0
      %v449 = vadd.f32 0.0, %v448
      %450 = vmatprep.mubr.bf16.mxu0 0
      %451 = vmatmul.mubr.bf16.gmra.mrb[0].mxu0 %v304
      %v452 = vpop.f32.mrb[0].mxu0
      %v453 = vadd.f32 0.0, %v452
      %v454 = vpop.f32.mrb[0].mxu0
      %v455 = vadd.f32 0.0, %v454
      %v456 = vpop.f32.mrb[0].mxu0
      %v457 = vadd.f32 0.0, %v456
      %v458 = vpop.f32.mrb[0].mxu0
      %v459 = vadd.f32 0.0, %v458
      %460 = vmatprep.mubr.bf16.mxu0 0
      %461 = vmatmul.mubr.bf16.gmra.mrb[0].mxu0 %v305
      %v462 = vpop.f32.mrb[0].mxu0
      %v463 = vadd.f32 0.0, %v462
      %v464 = vpop.f32.mrb[0].mxu0
      %v465 = vadd.f32 0.0, %v464
      %v466 = vpop.f32.mrb[0].mxu0
      %v467 = vadd.f32 0.0, %v466
      %v468 = vpop.f32.mrb[0].mxu0
      %v469 = vadd.f32 0.0, %v468
      %470 = vmatprep.mubr.bf16.mxu0 0
      %471 = vmatmul.mubr.bf16.gmra.mrb[0].mxu0 %v306
      %v472 = vpop.f32.mrb[0].mxu0
      %v473 = vadd.f32 0.0, %v472
      %v474 = vpop.f32.mrb[0].mxu0
      %v475 = vadd.f32 0.0, %v474
      %v476 = vpop.f32.mrb[0].mxu0
      %v477 = vadd.f32 0.0, %v476
      %v478 = vpop.f32.mrb[0].mxu0
      %v479 = vadd.f32 0.0, %v478
      %480 = vmatprep.mubr.bf16.mxu0 0
      %481 = vmatmul.mubr.bf16.gmra.mrb[0].mxu0 %v307
      %v482 = vpop.f32.mrb[0].mxu0
      %v483 = vadd.f32 0.0, %v482
      %v484 = vpop.f32.mrb[0].mxu0
      %v485 = vadd.f32 0.0, %v484
      %v486 = vpop.f32.mrb[0].mxu0
      %v487 = vadd.f32 0.0, %v486
      %v488 = vpop.f32.mrb[0].mxu0
      %v489 = vadd.f32 0.0, %v488
      %490 = vmatprep.mubr.bf16.mxu0 0
      %491 = vmatmul.mubr.bf16.gmra.mrb[0].mxu0 %v308
      %v492 = vpop.f32.mrb[0].mxu0
      %v493 = vadd.f32 0.0, %v492
      %v494 = vpop.f32.mrb[0].mxu0
      %v495 = vadd.f32 0.0, %v494
      %v496 = vpop.f32.mrb[0].mxu0
      %v497 = vadd.f32 0.0, %v496
      %v498 = vpop.f32.mrb[0].mxu0
      %v499 = vadd.f32 0.0, %v498
      %500 = vmatprep.mubr.bf16.mxu0 0
      %501 = vmatmul.mubr.bf16.gmra.mrb[0].mxu0 %v309
      %v502 = vpop.f32.mrb[0].mxu0
      %v503 = vadd.f32 0.0, %v502
      %v504 = vpop.f32.mrb[0].mxu0
      %v505 = vadd.f32 0.0, %v504
      %v506 = vpop.f32.mrb[0].mxu0
      %v507 = vadd.f32 0.0, %v506
      %v508 = vpop.f32.mrb[0].mxu0
      %v509 = vadd.f32 0.0, %v508
      %510 = vdwg.mxu0
      %v511 = vld [vmem:[%s223] sm:$0xff]
      %v512 = vld [vmem:[%s223 + $0x8] sm:$0xff]
      %v513 = vld [vmem:[%s223 + $0x10] sm:$0xff]
      %v514 = vld [vmem:[%s223 + $0x18] sm:$0xff]
      %v515 = vld [vmem:[%s223 + $0x20] sm:$0xff]
      %v516 = vld [vmem:[%s223 + $0x28] sm:$0xff]
      %v517 = vld [vmem:[%s223 + $0x30] sm:$0xff]
      %v518 = vld [vmem:[%s223 + $0x38] sm:$0xff]
      %v519 = vld [vmem:[%s223 + $0x40] sm:$0xff]
      %v520 = vld [vmem:[%s223 + $0x48] sm:$0xff]
      %v521 = vld [vmem:[%s223 + $0x50] sm:$0xff]
      %v522 = vld [vmem:[%s223 + $0x58] sm:$0xff]
      %v523 = vld [vmem:[%s223 + $0x60] sm:$0xff]
      %v524 = vld [vmem:[%s223 + $0x68] sm:$0xff]
      %v525 = vld [vmem:[%s223 + $0x70] sm:$0xff]
      %v526 = vld [vmem:[%s223 + $0x78] sm:$0xff]
      %528 = vset.pattern.permute.xlu0 0
      %529 = vperm.xlu0 %528, %v511
      %v530 = vpop.permute.xlu0 %529
      %533 = vset.pattern.permute.xlu0 0
      %534 = vperm.xlu0 %533, %v512
      %v535 = vpop.permute.xlu0 %534
      %538 = vset.pattern.permute.xlu0 0
      %539 = vperm.xlu0 %538, %v513
      %v540 = vpop.permute.xlu0 %539
      %543 = vset.pattern.permute.xlu0 0
      %544 = vperm.xlu0 %543, %v514
      %v545 = vpop.permute.xlu0 %544
      %548 = vset.pattern.permute.xlu0 0
      %549 = vperm.xlu0 %548, %v515
      %v550 = vpop.permute.xlu0 %549
      %553 = vset.pattern.permute.xlu0 0
      %554 = vperm.xlu0 %553, %v516
      %v555 = vpop.permute.xlu0 %554
      %558 = vset.pattern.permute.xlu0 0
      %559 = vperm.xlu0 %558, %v517
      %v560 = vpop.permute.xlu0 %559
      %563 = vset.pattern.permute.xlu0 0
      %564 = vperm.xlu0 %563, %v518
      %v565 = vpop.permute.xlu0 %564
      %568 = vset.pattern.permute.xlu0 0
      %569 = vperm.xlu0 %568, %v519
      %v570 = vpop.permute.xlu0 %569
      %573 = vset.pattern.permute.xlu0 0
      %574 = vperm.xlu0 %573, %v520
      %v575 = vpop.permute.xlu0 %574
      %578 = vset.pattern.permute.xlu0 0
      %579 = vperm.xlu0 %578, %v521
      %v580 = vpop.permute.xlu0 %579
      %583 = vset.pattern.permute.xlu0 0
      %584 = vperm.xlu0 %583, %v522
      %v585 = vpop.permute.xlu0 %584
      %588 = vset.pattern.permute.xlu0 0
      %589 = vperm.xlu0 %588, %v523
      %v590 = vpop.permute.xlu0 %589
      %593 = vset.pattern.permute.xlu0 0
      %594 = vperm.xlu0 %593, %v524
      %v595 = vpop.permute.xlu0 %594
      %598 = vset.pattern.permute.xlu0 0
      %599 = vperm.xlu0 %598, %v525
      %v600 = vpop.permute.xlu0 %599
      %603 = vset.pattern.permute.xlu0 0
      %604 = vperm.xlu0 %603, %v526
      %v605 = vpop.permute.xlu0 %604
      %v607 = vmul.f32 %v433, %v530
      %v608 = vmul.f32 %v437, %v535
      %v609 = vmul.f32 %v443, %v540
      %v610 = vmul.f32 %v447, %v545
      %v611 = vmul.f32 %v453, %v550
      %v612 = vmul.f32 %v457, %v555
      %v613 = vmul.f32 %v463, %v560
      %v614 = vmul.f32 %v467, %v565
      %v615 = vmul.f32 %v473, %v570
      %v616 = vmul.f32 %v477, %v575
      %v617 = vmul.f32 %v483, %v580
      %v618 = vmul.f32 %v487, %v585
      %v619 = vmul.f32 %v493, %v590
      %v620 = vmul.f32 %v497, %v595
      %v621 = vmul.f32 %v503, %v600
      %v622 = vmul.f32 %v507, %v605
      %v623 = vpack.c.bf16 %v608, %v607
      %v624 = vpack.c.bf16 %v610, %v609
      %v625 = vpack.c.bf16 %v612, %v611
      %v626 = vpack.c.bf16 %v614, %v613
      %v627 = vpack.c.bf16 %v616, %v615
      %v628 = vpack.c.bf16 %v618, %v617
      %v629 = vpack.c.bf16 %v620, %v619
      %v630 = vpack.c.bf16 %v622, %v621
      %v639 = vunpack.c.l.b16 %v623
      %v640 = vunpack.c.h.b16 %v623
      %v641 = vunpack.c.l.b16 %v624
      %v642 = vunpack.c.h.b16 %v624
      %v643 = vunpack.c.l.b16 %v625
      %v644 = vunpack.c.h.b16 %v625
      %v645 = vunpack.c.l.b16 %v626
      %v646 = vunpack.c.h.b16 %v626
      %v647 = vunpack.c.l.b16 %v627
      %v648 = vunpack.c.h.b16 %v627
      %v649 = vunpack.c.l.b16 %v628
      %v650 = vunpack.c.h.b16 %v628
      %v651 = vunpack.c.l.b16 %v629
      %v652 = vunpack.c.h.b16 %v629
      %v653 = vunpack.c.l.b16 %v630
      %v654 = vunpack.c.h.b16 %v630
      %v655 = vpack.c.b16 %v639, %v639
      %v656 = vpack.c.b16 %v640, %v640
      %v657 = vpack.c.b16 %v641, %v641
      %v658 = vpack.c.b16 %v642, %v642
      %v659 = vpack.c.b16 %v643, %v643
      %v660 = vpack.c.b16 %v644, %v644
      %v661 = vpack.c.b16 %v645, %v645
      %v662 = vpack.c.b16 %v646, %v646
      %v663 = vpack.c.b16 %v647, %v647
      %v664 = vpack.c.b16 %v648, %v648
      %v665 = vpack.c.b16 %v649, %v649
      %v666 = vpack.c.b16 %v650, %v650
      %v667 = vpack.c.b16 %v651, %v651
      %v668 = vpack.c.b16 %v652, %v652
      %v669 = vpack.c.b16 %v653, %v653
      %v670 = vpack.c.b16 %v654, %v654
      %687 = vst [vmem:[%s229] sm:$0xf] %v655
      %688 = vst [vmem:[%s229 + $0x4] sm:$0xf] %v656
      %689 = vst [vmem:[%s229 + $0x8] sm:$0xf] %v657
      %690 = vst [vmem:[%s229 + $0xc] sm:$0xf] %v658
      %691 = vst [vmem:[%s229 + $0x10] sm:$0xf] %v659
      %692 = vst [vmem:[%s229 + $0x14] sm:$0xf] %v660
      %693 = vst [vmem:[%s229 + $0x18] sm:$0xf] %v661
      %694 = vst [vmem:[%s229 + $0x1c] sm:$0xf] %v662
      %695 = vst [vmem:[%s229 + $0x20] sm:$0xf] %v663
      %696 = vst [vmem:[%s229 + $0x24] sm:$0xf] %v664
      %697 = vst [vmem:[%s229 + $0x28] sm:$0xf] %v665
      %698 = vst [vmem:[%s229 + $0x2c] sm:$0xf] %v666
      %699 = vst [vmem:[%s229 + $0x30] sm:$0xf] %v667
      %700 = vst [vmem:[%s229 + $0x34] sm:$0xf] %v668
      %701 = vst [vmem:[%s229 + $0x38] sm:$0xf] %v669
      %702 = vst [vmem:[%s229 + $0x3c] sm:$0xf] %v670
      %v703 = vpack.c.bf16 %v439, %v435
      %v704 = vpack.c.bf16 %v449, %v445
      %v705 = vpack.c.bf16 %v459, %v455
      %v706 = vpack.c.bf16 %v469, %v465
      %v707 = vpack.c.bf16 %v479, %v475
      %v708 = vpack.c.bf16 %v489, %v485
      %v709 = vpack.c.bf16 %v499, %v495
      %v710 = vpack.c.bf16 %v509, %v505
      %v719 = vunpack.c.l.b16 %v703
      %v720 = vunpack.c.h.b16 %v703
      %v721 = vunpack.c.l.b16 %v704
      %v722 = vunpack.c.h.b16 %v704
      %v723 = vunpack.c.l.b16 %v705
      %v724 = vunpack.c.h.b16 %v705
      %v725 = vunpack.c.l.b16 %v706
      %v726 = vunpack.c.h.b16 %v706
      %v727 = vunpack.c.l.b16 %v707
      %v728 = vunpack.c.h.b16 %v707
      %v729 = vunpack.c.l.b16 %v708
      %v730 = vunpack.c.h.b16 %v708
      %v731 = vunpack.c.l.b16 %v709
      %v732 = vunpack.c.h.b16 %v709
      %v733 = vunpack.c.l.b16 %v710
      %v734 = vunpack.c.h.b16 %v710
      %v735 = vpack.c.b16 %v719, %v719
      %v736 = vpack.c.b16 %v720, %v720
      %v737 = vpack.c.b16 %v721, %v721
      %v738 = vpack.c.b16 %v722, %v722
      %v739 = vpack.c.b16 %v723, %v723
      %v740 = vpack.c.b16 %v724, %v724
      %v741 = vpack.c.b16 %v725, %v725
      %v742 = vpack.c.b16 %v726, %v726
      %v743 = vpack.c.b16 %v727, %v727
      %v744 = vpack.c.b16 %v728, %v728
      %v745 = vpack.c.b16 %v729, %v729
      %v746 = vpack.c.b16 %v730, %v730
      %v747 = vpack.c.b16 %v731, %v731
      %v748 = vpack.c.b16 %v732, %v732
      %v749 = vpack.c.b16 %v733, %v733
      %v750 = vpack.c.b16 %v734, %v734
      %767 = vst [vmem:[%s235] sm:$0xf] %v735
      %768 = vst [vmem:[%s235 + $0x4] sm:$0xf] %v736
      %769 = vst [vmem:[%s235 + $0x8] sm:$0xf] %v737
      %770 = vst [vmem:[%s235 + $0xc] sm:$0xf] %v738
      %771 = vst [vmem:[%s235 + $0x10] sm:$0xf] %v739
      %772 = vst [vmem:[%s235 + $0x14] sm:$0xf] %v740
      %773 = vst [vmem:[%s235 + $0x18] sm:$0xf] %v741
      %774 = vst [vmem:[%s235 + $0x1c] sm:$0xf] %v742
      %775 = vst [vmem:[%s235 + $0x20] sm:$0xf] %v743
      %776 = vst [vmem:[%s235 + $0x24] sm:$0xf] %v744
      %777 = vst [vmem:[%s235 + $0x28] sm:$0xf] %v745
      %778 = vst [vmem:[%s235 + $0x2c] sm:$0xf] %v746
      %779 = vst [vmem:[%s235 + $0x30] sm:$0xf] %v747
      %780 = vst [vmem:[%s235 + $0x34] sm:$0xf] %v748
      %781 = vst [vmem:[%s235 + $0x38] sm:$0xf] %v749
      %782 = vst [vmem:[%s235 + $0x3c] sm:$0xf] %v750
      %s783 = smul.u32 16, %s16
      %p784 = scmp.lt.s32.totalorder %s783, 47
      %s785 = scalar_select %p784, %s783, 47
      %s786 = smul.addr %s785, 4
      %s787 = scalar_lea.vmem %s3, %s786
      %s788 = smul.u32 16, %s16
      %p789 = scmp.lt.s32.totalorder %s788, 47
      %s790 = scalar_select %p789, %s788, 47
      %s791 = smul.addr %s790, 4
      %s792 = scalar_lea.vmem %s4, %s791
      // Predicated region
      $region33: #{gcn_forward.6} parent=31 // pred_check
        %p793 = pneg %p107
      $region34: #{gcn_forward.6} parent=31 // pred_check_branch
        %795 = sbr.rel (%p793) target = $region36
      $region35: #{gcn_forward.6} parent=31 // pred_region
        %s796 = smul.u32 16, %s16
      $region36: #{gcn_forward.6} parent=31 // pred_fallthru
        _
      // Predicated region
      $region37: #{gcn_forward.6} parent=31 // pred_check
        %p797 = pneg %p133
      $region38: #{gcn_forward.6} parent=31 // pred_check_branch
        %799 = sbr.rel (%p797) target = $region40
      $region39: #{gcn_forward.6} parent=31 // pred_region
        %s800 = smul.u32 16, %s16
      $region40: #{gcn_forward.6} parent=31 // pred_fallthru
        _
    $region32: #{gcn_forward.6} parent=5 // pred_fallthru
      _
    %p801 = scmp.le.s32.totalorder 2, %s11
    // Predicated region
    $region41: #{gcn_forward.6} parent=5 // pred_check
      %p802 = pneg %p801
    $region42: #{gcn_forward.6} parent=5 // pred_check_branch
      %804 = sbr.rel (%p802) target = $region44
    $region43: #{gcn_forward.6} parent=5 // pred_region
      %s805 = ssub.s32 %s11, 2
      // Predicated region
      $region45: #{gcn_forward.6} parent=43 // pred_check
        %p806 = pneg %p113
      $region46: #{gcn_forward.6} parent=43 // pred_check_branch
        %808 = sbr.rel (%p806) target = $region48
      $region47: #{gcn_forward.6} parent=43 // pred_region
        %s809 = smul.u32 16, %s17
        %p810 = scmp.lt.s32.totalorder %s809, 47
        %s811 = scalar_select %p810, %s809, 47
        %s812 = smul.addr %s811, 4
        %s813 = scalar_lea.vmem %s3, %s812
      $region48: #{gcn_forward.6} parent=43 // pred_fallthru
        _
      // Predicated region
      $region49: #{gcn_forward.6} parent=43 // pred_check
        %p814 = pneg %p139
      $region50: #{gcn_forward.6} parent=43 // pred_check_branch
        %816 = sbr.rel (%p814) target = $region52
      $region51: #{gcn_forward.6} parent=43 // pred_region
        %s817 = smul.u32 16, %s17
        %p818 = scmp.lt.s32.totalorder %s817, 47
        %s819 = scalar_select %p818, %s817, 47
        %s820 = smul.addr %s819, 4
        %s821 = scalar_lea.vmem %s4, %s820
      $region52: #{gcn_forward.6} parent=43 // pred_fallthru
        _
    $region44: #{gcn_forward.6} parent=5 // pred_fallthru
      _
  $region6: #{gcn_forward.6} parent=0 // loop_footer
    %s15 = sadd.s32 1, %s11
  $region7: #{gcn_forward.6} parent=0 // loop_footer_branch
    %10 = sbr.rel target = $region3
  $region8: #{gcn_forward.6} parent=0 // loop_exit
    _

// kernel: gcn_forward.7
$region0: #{gcn_forward.7}
  #allocation0 [shape = 'u32[]', space=smem, size = 0x4, offset = 0x4, fixed_abs, tag = 'smem constant byte address 0x4 - core index']
  #allocation1 [shape = 'u32[144,128]{1,0:T(1,128)}', space=vmem, size = 0x12000, scoped, tag = 'internal scratch']
  #allocation2 [shape = 'f32[128,128]{1,0:T(8,128)}', space=vmem, size = 0x10000, scoped, tag = 'scratch operand']
  %s0 = inlined_call_operand.vmem [shape: s8[384,384], index: 0, kind: input, shape index: {}]
  %s1 = inlined_call_operand.vmem [shape: bf16[384,128], index: 1, kind: input, shape index: {}]
  %s2 = inlined_call_operand.vmem [shape: f32[384,1], index: 2, kind: input, shape index: {}]
  %s3 = inlined_call_operand.vmem [shape: bf16[384,128], index: 3, kind: input, shape index: {}]
  %s4 = inlined_call_operand.vmem [shape: f32[1,128], index: 4, kind: input, shape index: {}]
  %s5 = inlined_call_operand.vmem [shape: f32[1,128], index: 5, kind: input, shape index: {}]
  %s6 = inlined_call_operand.vmem [shape: bf16[384,128], index: 6, kind: output, shape index: {}]
  %s7 = sld [smem:[#allocation0]]
  $region107: #{gcn_forward.7} parent=0
    _
  %s9 = ssub.s32 1, %s7
  %s10 = scalar_select 0, %s9, %s7
  $region1: #{gcn_forward.7} parent=0
    #allocation3 [shape = 'u8[32768]{0}', space=vmem, size = 0x8000, scoped, tag = 'input window, operand 0']
    loop: start=0, step=1, limit=11
    $region2: #{gcn_forward.7} parent=1 // loop_pre_header
      _
    $region3: #{gcn_forward.7} parent=1 // loop_header
      %s12 = sphi 0, %s16
      %p13 = scmp.ge.s32.totalorder %s12, 11
      %s19 = sphi 0, %s31
      %s20 = sphi 0, %s27
      %s21 = sphi 0, %s19
      %s22 = sphi 0, %s20
      %s23 = sphi 0, %s21
      %s24 = sphi 0, %s22
      %s36 = sphi 0, %s38
      %s39 = sphi 0, %s36
      %s40 = sphi 0, %s39
      %s56 = sphi 0, %s40
      %s60 = sphi 0, %s60
      %s62 = sphi 0, %s60
      %s63 = sphi 0, %s62
      %s77 = sphi 0, %s63
      %s83 = sphi 0, %s85
      %s86 = sphi 0, %s83
      %s87 = sphi 0, %s86
      %s103 = sphi 0, %s87
      %s109 = sphi 0, %s111
      %s112 = sphi 0, %s109
      %s113 = sphi 0, %s112
      %s129 = sphi 0, %s113
      %s133 = sphi 0, %s133
      %s135 = sphi 0, %s133
      %s136 = sphi 0, %s135
      %s150 = sphi 0, %s136
      %s154 = sphi 0, %s154
      %s156 = sphi 0, %s154
      %s157 = sphi 0, %s156
      %s171 = sphi 0, %s157
      %s177 = sphi 0, %s179
      %s180 = sphi 0, %s177
      %s181 = sphi 0, %s180
      %s197 = sphi 0, %s181
    $region4: #{gcn_forward.7} parent=1 // loop_header_branch
      %15 = sbr.rel (%p13) target = $region8
    $region5: #{gcn_forward.7} parent=1 // loop_body
      %s17 = ssub.s32 %s12, 1
      %s18 = ssub.s32 %s12, 2
      %s25 = sadd.s32 1, %s20
      %p26 = scmp.ge.s32.totalorder %s25, 3
      %s27 = scalar_select %p26, 0, %s25
      %s28 = sadd.s32 1, %s19
      %s29 = scalar_select %p26, %s28, %s19
      %p30 = scmp.ge.s32.totalorder %s29, 3
      %s31 = scalar_select %p30, 0, %s29
      %s32 = ssub.s32 %s19, %s31
      %s33 = ssub.s32 %s20, %s27
      %s34 = sor.u32 %s32, %s33
      %p35 = scmp.eq.s32.totalorder %s34, 0
      %s37 = sadd.s32 %s36, 1
      %s38 = scalar_select %p35, %s36, %s37
      %p41 = pneg %p35
      %p42 = scmp.eq.s32.totalorder %s12, 8
      %p43 = por %p41, %p42
      %p44 = scmp.ne.s32.totalorder %s36, %s39
      %p45 = scmp.eq.s32.totalorder %s12, 0
      %p46 = por %p44, %p45
      %p47 = scmp.ne.s32.totalorder %s36, %s39
      %p48 = scmp.eq.s32.totalorder %s17, 8
      %p49 = por %p47, %p48
      %p50 = scmp.ne.s32.totalorder %s39, %s40
      %p51 = scmp.eq.s32.totalorder %s17, 0
      %p52 = por %p50, %p51
      %p53 = scmp.ne.s32.totalorder %s39, %s40
      %p54 = scmp.eq.s32.totalorder %s18, 8
      %p55 = por %p53, %p54
      %p57 = scmp.ne.s32.totalorder %s40, %s56
      %p58 = scmp.eq.s32.totalorder %s18, 0
      %p59 = por %p57, %p58
      %s61 = sadd.s32 %s60, 1
      %p64 = scmp.eq.s32.totalorder %s12, 8
      %p65 = scmp.ne.s32.totalorder %s60, %s62
      %p66 = scmp.eq.s32.totalorder %s12, 0
      %p67 = por %p65, %p66
      %p68 = scmp.ne.s32.totalorder %s60, %s62
      %p69 = scmp.eq.s32.totalorder %s17, 8
      %p70 = por %p68, %p69
      %p71 = scmp.ne.s32.totalorder %s62, %s63
      %p72 = scmp.eq.s32.totalorder %s17, 0
      %p73 = por %p71, %p72
      %p74 = scmp.ne.s32.totalorder %s62, %s63
      %p75 = scmp.eq.s32.totalorder %s18, 8
      %p76 = por %p74, %p75
      %p78 = scmp.ne.s32.totalorder %s63, %s77
      %p79 = scmp.eq.s32.totalorder %s18, 0
      %p80 = por %p78, %p79
      %s81 = ssub.s32 %s19, %s31
      %p82 = scmp.eq.s32.totalorder %s81, 0
      %s84 = sadd.s32 %s83, 1
      %s85 = scalar_select %p82, %s83, %s84
      %p88 = pneg %p82
      %p89 = scmp.eq.s32.totalorder %s12, 8
      %p90 = por %p88, %p89
      %p91 = scmp.ne.s32.totalorder %s83, %s86
      %p92 = scmp.eq.s32.totalorder %s12, 0
      %p93 = por %p91, %p92
      %p94 = scmp.ne.s32.totalorder %s83, %s86
      %p95 = scmp.eq.s32.totalorder %s17, 8
      %p96 = por %p94, %p95
      %p97 = scmp.ne.s32.totalorder %s86, %s87
      %p98 = scmp.eq.s32.totalorder %s17, 0
      %p99 = por %p97, %p98
      %p100 = scmp.ne.s32.totalorder %s86, %s87
      %p101 = scmp.eq.s32.totalorder %s18, 8
      %p102 = por %p100, %p101
      %p104 = scmp.ne.s32.totalorder %s87, %s103
      %p105 = scmp.eq.s32.totalorder %s18, 0
      %p106 = por %p104, %p105
      %s107 = ssub.s32 %s19, %s31
      %p108 = scmp.eq.s32.totalorder %s107, 0
      %s110 = sadd.s32 %s109, 1
      %s111 = scalar_select %p108, %s109, %s110
      %p114 = pneg %p108
      %p115 = scmp.eq.s32.totalorder %s12, 8
      %p116 = por %p114, %p115
      %p117 = scmp.ne.s32.totalorder %s109, %s112
      %p118 = scmp.eq.s32.totalorder %s12, 0
      %p119 = por %p117, %p118
      %p120 = scmp.ne.s32.totalorder %s109, %s112
      %p121 = scmp.eq.s32.totalorder %s17, 8
      %p122 = por %p120, %p121
      %p123 = scmp.ne.s32.totalorder %s112, %s113
      %p124 = scmp.eq.s32.totalorder %s17, 0
      %p125 = por %p123, %p124
      %p126 = scmp.ne.s32.totalorder %s112, %s113
      %p127 = scmp.eq.s32.totalorder %s18, 8
      %p128 = por %p126, %p127
      %p130 = scmp.ne.s32.totalorder %s113, %s129
      %p131 = scmp.eq.s32.totalorder %s18, 0
      %p132 = por %p130, %p131
      %s134 = sadd.s32 %s133, 1
      %p137 = scmp.eq.s32.totalorder %s12, 8
      %p138 = scmp.ne.s32.totalorder %s133, %s135
      %p139 = scmp.eq.s32.totalorder %s12, 0
      %p140 = por %p138, %p139
      %p141 = scmp.ne.s32.totalorder %s133, %s135
      %p142 = scmp.eq.s32.totalorder %s17, 8
      %p143 = por %p141, %p142
      %p144 = scmp.ne.s32.totalorder %s135, %s136
      %p145 = scmp.eq.s32.totalorder %s17, 0
      %p146 = por %p144, %p145
      %p147 = scmp.ne.s32.totalorder %s135, %s136
      %p148 = scmp.eq.s32.totalorder %s18, 8
      %p149 = por %p147, %p148
      %p151 = scmp.ne.s32.totalorder %s136, %s150
      %p152 = scmp.eq.s32.totalorder %s18, 0
      %p153 = por %p151, %p152
      %s155 = sadd.s32 %s154, 1
      %p158 = scmp.eq.s32.totalorder %s12, 8
      %p159 = scmp.ne.s32.totalorder %s154, %s156
      %p160 = scmp.eq.s32.totalorder %s12, 0
      %p161 = por %p159, %p160
      %p162 = scmp.ne.s32.totalorder %s154, %s156
      %p163 = scmp.eq.s32.totalorder %s17, 8
      %p164 = por %p162, %p163
      %p165 = scmp.ne.s32.totalorder %s156, %s157
      %p166 = scmp.eq.s32.totalorder %s17, 0
      %p167 = por %p165, %p166
      %p168 = scmp.ne.s32.totalorder %s156, %s157
      %p169 = scmp.eq.s32.totalorder %s18, 8
      %p170 = por %p168, %p169
      %p172 = scmp.ne.s32.totalorder %s157, %s171
      %p173 = scmp.eq.s32.totalorder %s18, 0
      %p174 = por %p172, %p173
      %s175 = ssub.s32 %s19, %s31
      %p176 = scmp.eq.s32.totalorder %s175, 0
      %s178 = sadd.s32 %s177, 1
      %s179 = scalar_select %p176, %s177, %s178
      %p182 = pneg %p176
      %p183 = scmp.eq.s32.totalorder %s12, 8
      %p184 = por %p182, %p183
      %p185 = scmp.ne.s32.totalorder %s177, %s180
      %p186 = scmp.eq.s32.totalorder %s12, 0
      %p187 = por %p185, %p186
      %p188 = scmp.ne.s32.totalorder %s177, %s180
      %p189 = scmp.eq.s32.totalorder %s17, 8
      %p190 = por %p188, %p189
      %p191 = scmp.ne.s32.totalorder %s180, %s181
      %p192 = scmp.eq.s32.totalorder %s17, 0
      %p193 = por %p191, %p192
      %p194 = scmp.ne.s32.totalorder %s180, %s181
      %p195 = scmp.eq.s32.totalorder %s18, 8
      %p196 = por %p194, %p195
      %p198 = scmp.ne.s32.totalorder %s181, %s197
      %p199 = scmp.eq.s32.totalorder %s18, 0
      %p200 = por %p198, %p199
      %p201 = scmp.le.s32.totalorder 1, %s12
      %p202 = scmp.lt.s32.totalorder %s12, 10
      %p203 = pnand %p201, %p202
      %p204 = pneg %p203
      // Predicated region
      $region9: #{gcn_forward.7} parent=5 // pred_check
        _
      $region10: #{gcn_forward.7} parent=5 // pred_check_branch
        %206 = sbr.rel (%p203) target = $region12
      $region11: #{gcn_forward.7} parent=5 // pred_region
        %s207 = ssub.s32 %s12, 1
        // Predicated region
        $region13: #{gcn_forward.7} parent=11 // pred_check
          %p208 = pneg %p73
        $region14: #{gcn_forward.7} parent=11 // pred_check_branch
          %210 = sbr.rel (%p208) target = $region16
        $region15: #{gcn_forward.7} parent=11 // pred_region
          _
        $region16: #{gcn_forward.7} parent=11 // pred_fallthru
          _
        // Predicated region
        $region17: #{gcn_forward.7} parent=11 // pred_check
          %p211 = pneg %p146
        $region18: #{gcn_forward.7} parent=11 // pred_check_branch
          %213 = sbr.rel (%p211) target = $region20
        $region19: #{gcn_forward.7} parent=11 // pred_region
          _
        $region20: #{gcn_forward.7} parent=11 // pred_fallthru
          _
        // Predicated region
        $region21: #{gcn_forward.7} parent=11 // pred_check
          %p214 = pneg %p167
        $region22: #{gcn_forward.7} parent=11 // pred_check_branch
          %216 = sbr.rel (%p214) target = $region24
        $region23: #{gcn_forward.7} parent=11 // pred_region
          _
        $region24: #{gcn_forward.7} parent=11 // pred_fallthru
          _
      $region12: #{gcn_forward.7} parent=5 // pred_fallthru
        _
      %p217 = scmp.lt.s32.totalorder %s12, 9
      // Predicated region
      $region25: #{gcn_forward.7} parent=5 // pred_check
        %p218 = pneg %p217
      $region26: #{gcn_forward.7} parent=5 // pred_check_branch
        %220 = sbr.rel (%p218) target = $region28
      $region27: #{gcn_forward.7} parent=5 // pred_region
        // Predicated region
        $region29: #{gcn_forward.7} parent=27 // pred_check
          %p221 = pneg %p46
        $region30: #{gcn_forward.7} parent=27 // pred_check_branch
          %223 = sbr.rel (%p221) target = $region32
        $region31: #{gcn_forward.7} parent=27 // pred_region
          %s224 = sand.u32 %s36, 1
          %s225 = sand.u32 %s36, 1
          %s226 = smul.addr %s225, 32
          %s227 = scalar_lea.vmem [#allocation3], %s226
          %s228 = smul.u32 4, %s19
          %s229 = smul.addr %s228, 3
          %s230 = sadd.s32 %s20, %s229
          %s231 = smul.addr %s230, 8
          %s232 = scalar_lea.vmem %s0, %s231
          // Predicated region
          $region33: #{gcn_forward.7} parent=31 // pred_check
            _
          $region34: #{gcn_forward.7} parent=31 // pred_check_branch
            %234 = sbr.rel (0) target = $region36
          $region35: #{gcn_forward.7} parent=31 // pred_region
            // Predicated region
            $region37: #{gcn_forward.7} parent=35 // pred_check
              _
            $region38: #{gcn_forward.7} parent=35 // pred_check_branch
              %236 = sbr.rel (0) target = $region40
            $region39: #{gcn_forward.7} parent=35 // pred_region
              // Predicated region
              $region52: #{gcn_forward.7} parent=39 // pred_check
                _
              $region53: #{gcn_forward.7} parent=39 // pred_check_branch
                %257 = sbr.rel (0) target = $region55
              $region54: #{gcn_forward.7} parent=39 // pred_region
                loop: start=0, step=1, limit=1
                $region56: #{gcn_forward.7} parent=54 // loop_pre_header
                  _
                $region57: #{gcn_forward.7} parent=54 // loop_header
                  %s259 = sphi 0, %s263
                  %p260 = scmp.ge.s32.totalorder %s259, 1
                  %s264 = sphi %s232, %s232
                  %s265 = sphi %s227, %s227
                $region58: #{gcn_forward.7} parent=54 // loop_header_branch
                  %262 = sbr.rel (%p260) target = $region62
                $region59: #{gcn_forward.7} parent=54 // loop_body
                  %v266 = vld [vmem:[%s264] sm:$0xff]
                  %267 = vst [vmem:[%s265] sm:$0xff] %v266
                  %v268 = vld [vmem:[%s264 + $0x18] sm:$0xff]
                  %269 = vst [vmem:[%s265 + $0x8] sm:$0xff] %v268
                  %v270 = vld [vmem:[%s264 + $0x30] sm:$0xff]
                  %271 = vst [vmem:[%s265 + $0x10] sm:$0xff] %v270
                  %v272 = vld [vmem:[%s264 + $0x48] sm:$0xff]
                  %273 = vst [vmem:[%s265 + $0x18] sm:$0xff] %v272
                $region60: #{gcn_forward.7} parent=54 // loop_footer
                  %s263 = sadd.s32 1, %s259
                $region61: #{gcn_forward.7} parent=54 // loop_footer_branch
                  %258 = sbr.rel target = $region57
                $region62: #{gcn_forward.7} parent=54 // loop_exit
                  _
              $region55: #{gcn_forward.7} parent=39 // pred_fallthru
                _
              // Predicated region
              $region63: #{gcn_forward.7} parent=39 // pred_check
                _
              $region64: #{gcn_forward.7} parent=39 // pred_check_branch
                %275 = sbr.rel target = $region66
              $region65: #{gcn_forward.7} parent=39 // pred_region
                _
              $region66: #{gcn_forward.7} parent=39 // pred_fallthru
                _
            $region40: #{gcn_forward.7} parent=35 // pred_fallthru
              _
            // Predicated region
            $region41: #{gcn_forward.7} parent=35 // pred_check
              _
            $region42: #{gcn_forward.7} parent=35 // pred_check_branch
              %238 = sbr.rel target = $region44
            $region43: #{gcn_forward.7} parent=35 // pred_region
              loop: start=0, step=1, limit=1
              $region45: #{gcn_forward.7} parent=43 // loop_pre_header
                _
              $region46: #{gcn_forward.7} parent=43 // loop_header
                %s241 = sphi 0, %s245
                %p242 = scmp.ge.s32.totalorder %s241, 1
                %s246 = sphi %s232, %s232
                %s247 = sphi %s227, %s227
              $region47: #{gcn_forward.7} parent=43 // loop_header_branch
                %244 = sbr.rel (%p242) target = $region51
              $region48: #{gcn_forward.7} parent=43 // loop_body
                %v248 = vld [vmem:[%s246] sm:$0xff]
                %249 = vst [vmem:[%s247] sm:$0xff] %v248
                %v250 = vld [vmem:[%s246 + $0x18] sm:$0xff]
                %251 = vst [vmem:[%s247 + $0x8] sm:$0xff] %v250
                %v252 = vld [vmem:[%s246 + $0x30] sm:$0xff]
                %253 = vst [vmem:[%s247 + $0x10] sm:$0xff] %v252
                %v254 = vld [vmem:[%s246 + $0x48] sm:$0xff]
                %255 = vst [vmem:[%s247 + $0x18] sm:$0xff] %v254
              $region49: #{gcn_forward.7} parent=43 // loop_footer
                %s245 = sadd.s32 1, %s241
              $region50: #{gcn_forward.7} parent=43 // loop_footer_branch
                %240 = sbr.rel target = $region46
              $region51: #{gcn_forward.7} parent=43 // loop_exit
                _
            $region44: #{gcn_forward.7} parent=35 // pred_fallthru
              _
          $region36: #{gcn_forward.7} parent=31 // pred_fallthru
            _
          %276 = vnop
        $region32: #{gcn_forward.7} parent=27 // pred_fallthru
          _
        // Predicated region
        $region67: #{gcn_forward.7} parent=27 // pred_check
          %p277 = pneg %p93
        $region68: #{gcn_forward.7} parent=27 // pred_check_branch
          %279 = sbr.rel (%p277) target = $region70
        $region69: #{gcn_forward.7} parent=27 // pred_region
          %s280 = smul.u32 16, %s19
          %p281 = scmp.lt.s32.totalorder %s280, 47
          %s282 = scalar_select %p281, %s280, 47
          %s283 = smul.addr %s282, 8
          %s284 = scalar_lea.vmem %s2, %s283
          %s285 = smul.u32 16, %s19
        $region70: #{gcn_forward.7} parent=27 // pred_fallthru
          _
        // Predicated region
        $region71: #{gcn_forward.7} parent=27 // pred_check
          %p286 = pneg %p119
        $region72: #{gcn_forward.7} parent=27 // pred_check_branch
          %288 = sbr.rel (%p286) target = $region74
        $region73: #{gcn_forward.7} parent=27 // pred_region
          %s289 = smul.u32 16, %s19
          %p290 = scmp.lt.s32.totalorder %s289, 47
          %s291 = scalar_select %p290, %s289, 47
          %s292 = smul.addr %s291, 4
          %s293 = scalar_lea.vmem %s3, %s292
          %s294 = smul.u32 16, %s19
        $region74: #{gcn_forward.7} parent=27 // pred_fallthru
          _
      $region28: #{gcn_forward.7} parent=5 // pred_fallthru
        _
      %p295 = scmp.le.s32.totalorder 1, %s12
      %p296 = scmp.lt.s32.totalorder %s12, 10
      %p297 = pnand %p295, %p296
      %p298 = pneg %p297
      // Predicated region
      $region75: #{gcn_forward.7} parent=5 // pred_check
        _
      $region76: #{gcn_forward.7} parent=5 // pred_check_branch
        %300 = sbr.rel (%p297) target = $region78
      $region77: #{gcn_forward.7} parent=5 // pred_region
        %s301 = ssub.s32 %s12, 1
        %s302 = sand.u32 %s39, 1
        %s303 = sand.u32 %s39, 1
        %s304 = smul.addr %s303, 32
        %s305 = scalar_lea.vmem [#allocation3], %s304
        // Predicated region
        $region79: #{gcn_forward.7} parent=77 // pred_check
          %p306 = pneg %p52
        $region80: #{gcn_forward.7} parent=77 // pred_check_branch
          %308 = sbr.rel (%p306) target = $region82
        $region81: #{gcn_forward.7} parent=77 // pred_region
          _
        $region82: #{gcn_forward.7} parent=77 // pred_fallthru
          _
        %s309 = sand.u32 %s39, 1
        %s310 = sand.u32 %s39, 1
        %s311 = smul.addr %s310, 32
        %s312 = scalar_lea.vmem [#allocation3], %s311
        %p313 = pneg %p52
        %p314 = pneg %p49
        %p315 = pneg %p73
        %p316 = pneg %p70
        %s317 = smul.u32 16, %s21
        %p318 = scmp.lt.s32.totalorder %s317, 47
        %s319 = scalar_select %p318, %s317, 47
        %s320 = smul.addr %s319, 8
        %s321 = scalar_lea.vmem %s2, %s320
        %p322 = pneg %p99
        %p323 = pneg %p96
        %s324 = smul.u32 16, %s21
        %p325 = scmp.lt.s32.totalorder %s324, 47
        %s326 = scalar_select %p325, %s324, 47
        %s327 = smul.addr %s326, 4
        %s328 = scalar_lea.vmem %s3, %s327
        %p329 = pneg %p125
        %p330 = pneg %p122
        %p331 = pneg %p146
        %p332 = pneg %p143
        %p333 = pneg %p167
        %p334 = pneg %p164
        %p335 = pneg %p193
        %p336 = pneg %p190
        %s337 = smul.u32 16, %s21
        %p338 = scmp.lt.s32.totalorder %s337, 47
        %s339 = scalar_select %p338, %s337, 47
        %s340 = smul.addr %s339, 4
        %s341 = scalar_lea.vmem %s6, %s340
        %s342 = smul.u32 4, %s21
        %s343 = smul.u32 16, %s21
        %p344 = scmp.lt.s32.totalorder %s343, 47
        %s345 = scalar_select %p344, %s343, 47
        %s346 = smul.addr %s345, 8
        %s347 = scalar_lea.vmem %s2, %s346
        %s348 = smul.u32 16, %s21
        %s349 = smul.u32 16, %s21
        %p350 = scmp.lt.s32.totalorder %s349, 47
        %s351 = scalar_select %p350, %s349, 47
        %s352 = smul.addr %s351, 4
        %s353 = scalar_lea.vmem %s3, %s352
        %s354 = smul.u32 16, %s21
        %s355 = smul.u32 16, %s21
        %p356 = scmp.lt.s32.totalorder %s355, 47
        %s357 = scalar_select %p356, %s355, 47
        %s358 = smul.addr %s357, 4
        %s359 = scalar_lea.vmem %s6, %s358
        %s360 = smul.u32 16, %s21
        %s362 = smul.u32 %s22, 128
        %s363 = sshra.s32 %s362, 3
        %s364 = sand.u32 %s362, 7
        %s365 = smul.addr %s363, 4
        %s366 = scalar_lea.vmem %s1, %s365
        %v367 = vld [vmem:[%s366] sm:$0xf]
        %v368 = vld [vmem:[%s366 + $0x4] sm:$0xf]
        %v369 = vld [vmem:[%s366 + $0x8] sm:$0xf]
        %v370 = vld [vmem:[%s366 + $0xc] sm:$0xf]
        %v371 = vld [vmem:[%s366 + $0x10] sm:$0xf]
        %v372 = vld [vmem:[%s366 + $0x14] sm:$0xf]
        %v373 = vld [vmem:[%s366 + $0x18] sm:$0xf]
        %v374 = vld [vmem:[%s366 + $0x1c] sm:$0xf]
        %v375 = vld [vmem:[%s366 + $0x20] sm:$0xf]
        %v376 = vld [vmem:[%s366 + $0x24] sm:$0xf]
        %v377 = vld [vmem:[%s366 + $0x28] sm:$0xf]
        %v378 = vld [vmem:[%s366 + $0x2c] sm:$0xf]
        %v379 = vld [vmem:[%s366 + $0x30] sm:$0xf]
        %v380 = vld [vmem:[%s366 + $0x34] sm:$0xf]
        %v381 = vld [vmem:[%s366 + $0x38] sm:$0xf]
        %v382 = vld [vmem:[%s366 + $0x3c] sm:$0xf]
        %v383 = vld [vmem:[%s305] sm:$0xff]
        %v384 = vld [vmem:[%s305 + $0x8] sm:$0xff]
        %v385 = vld [vmem:[%s305 + $0x10] sm:$0xff]
        %v386 = vld [vmem:[%s305 + $0x18] sm:$0xff]
        %v387 = vunpack.c.l.s8.bf16 %v383
        %v388 = vunpack.c.h.s8.bf16 %v383
        %v389 = vunpack.c.l.s8.bf16 %v384
        %v390 = vunpack.c.h.s8.bf16 %v384
        %v391 = vunpack.c.l.s8.bf16 %v385
        %v392 = vunpack.c.h.s8.bf16 %v385
        %v393 = vunpack.c.l.s8.bf16 %v386
        %v394 = vunpack.c.h.s8.bf16 %v386
        %v411 = vunpack.c.l.b16 %v367
        %v412 = vunpack.c.l.b16 %v368
        %v413 = vunpack.c.l.b16 %v369
        %v414 = vunpack.c.l.b16 %v370
        %v415 = vunpack.c.l.b16 %v371
        %v416 = vunpack.c.l.b16 %v372
        %v417 = vunpack.c.l.b16 %v373
        %v418 = vunpack.c.l.b16 %v374
        %v419 = vunpack.c.l.b16 %v375
        %v420 = vunpack.c.l.b16 %v376
        %v421 = vunpack.c.l.b16 %v377
        %v422 = vunpack.c.l.b16 %v378
        %v423 = vunpack.c.l.b16 %v379
        %v424 = vunpack.c.l.b16 %v380
        %v425 = vunpack.c.l.b16 %v381
        %v426 = vunpack.c.l.b16 %v382
        %v427 = vpack.c.b16 %v412, %v411
        %v428 = vpack.c.b16 %v414, %v413
        %v429 = vpack.c.b16 %v416, %v415
        %v430 = vpack.c.b16 %v418, %v417
        %v431 = vpack.c.b16 %v420, %v419
        %v432 = vpack.c.b16 %v422, %v421
        %v433 = vpack.c.b16 %v424, %v423
        %v434 = vpack.c.b16 %v426, %v425
        %443 = vmatprep.subr.bf16.mxu0 0
        %444 = vmatpush1.bf16.msra.mxu0 %v427
        %445 = vmatprep.subr.bf16.mxu0 0
        %446 = vmatpush1.bf16.msra.mxu0 %v428
        %447 = vmatprep.subr.bf16.mxu0 0
        %448 = vmatpush1.bf16.msra.mxu0 %v429
        %449 = vmatprep.subr.bf16.mxu0 0
        %450 = vmatpush1.bf16.msra.mxu0 %v430
        %451 = vmatprep.subr.bf16.mxu0 0
        %452 = vmatpush1.bf16.msra.mxu0 %v431
        %453 = vmatprep.subr.bf16.mxu0 0
        %454 = vmatpush1.bf16.msra.mxu0 %v432
        %455 = vmatprep.subr.bf16.mxu0 0
        %456 = vmatpush1.bf16.msra.mxu0 %v433
        %457 = vmatprep.subr.bf16.mxu0 0
        %458 = vmatpush1.bf16.msra.mxu0 %v434
        %459 = vmatprep.subr.bf16.mxu0 0
        %460 = vmatpush1.bf16.msra.mxu0 0
        %461 = vmatprep.subr.bf16.mxu0 0
        %462 = vmatpush1.bf16.msra.mxu0 0
        %463 = vmatprep.subr.bf16.mxu0 0
        %464 = vmatpush1.bf16.msra.mxu0 0
        %465 = vmatprep.subr.bf16.mxu0 0
        %466 = vmatpush1.bf16.msra.mxu0 0
        %467 = vmatprep.subr.bf16.mxu0 0
        %468 = vmatpush1.bf16.msra.mxu0 0
        %469 = vmatprep.subr.bf16.mxu0 0
        %470 = vmatpush1.bf16.msra.mxu0 0
        %471 = vmatprep.subr.bf16.mxu0 0
        %472 = vmatpush1.bf16.msra.mxu0 0
        %473 = vmatprep.subr.bf16.mxu0 0
        %474 = vmatpush1.bf16.msra.mxu0 0
        %475 = vmatprep.mubr.bf16.mxu0 0
        %476 = vmatmul.mubr.bf16.gmra.mrb[0].mxu0 %v387
        %v477 = vpop.f32.mrb[0].mxu0
        %v478 = vadd.f32 0.0, %v477
        %v479 = vpop.f32.mrb[0].mxu0
        %v480 = vpop.f32.mrb[0].mxu0
        %v481 = vadd.f32 0.0, %v480
        %v482 = vpop.f32.mrb[0].mxu0
        %483 = vmatprep.mubr.bf16.mxu0 0
        %484 = vmatmul.mubr.bf16.gmra.mrb[0].mxu0 %v388
        %v485 = vpop.f32.mrb[0].mxu0
        %v486 = vadd.f32 0.0, %v485
        %v487 = vpop.f32.mrb[0].mxu0
        %v488 = vpop.f32.mrb[0].mxu0
        %v489 = vadd.f32 0.0, %v488
        %v490 = vpop.f32.mrb[0].mxu0
        %491 = vmatprep.mubr.bf16.mxu0 0
        %492 = vmatmul.mubr.bf16.gmra.mrb[0].mxu0 %v389
        %v493 = vpop.f32.mrb[0].mxu0
        %v494 = vadd.f32 0.0, %v493
        %v495 = vpop.f32.mrb[0].mxu0
        %v496 = vpop.f32.mrb[0].mxu0
        %v497 = vadd.f32 0.0, %v496
        %v498 = vpop.f32.mrb[0].mxu0
        %499 = vmatprep.mubr.bf16.mxu0 0
        %500 = vmatmul.mubr.bf16.gmra.mrb[0].mxu0 %v390
        %v501 = vpop.f32.mrb[0].mxu0
        %v502 = vadd.f32 0.0, %v501
        %v503 = vpop.f32.mrb[0].mxu0
        %v504 = vpop.f32.mrb[0].mxu0
        %v505 = vadd.f32 0.0, %v504
        %v506 = vpop.f32.mrb[0].mxu0
        %507 = vmatprep.mubr.bf16.mxu0 0
        %508 = vmatmul.mubr.bf16.gmra.mrb[0].mxu0 %v391
        %v509 = vpop.f32.mrb[0].mxu0
        %v510 = vadd.f32 0.0, %v509
        %v511 = vpop.f32.mrb[0].mxu0
        %v512 = vpop.f32.mrb[0].mxu0
        %v513 = vadd.f32 0.0, %v512
        %v514 = vpop.f32.mrb[0].mxu0
        %515 = vmatprep.mubr.bf16.mxu0 0
        %516 = vmatmul.mubr.bf16.gmra.mrb[0].mxu0 %v392
        %v517 = vpop.f32.mrb[0].mxu0
        %v518 = vadd.f32 0.0, %v517
        %v519 = vpop.f32.mrb[0].mxu0
        %v520 = vpop.f32.mrb[0].mxu0
        %v521 = vadd.f32 0.0, %v520
        %v522 = vpop.f32.mrb[0].mxu0
        %523 = vmatprep.mubr.bf16.mxu0 0
        %524 = vmatmul.mubr.bf16.gmra.mrb[0].mxu0 %v393
        %v525 = vpop.f32.mrb[0].mxu0
        %v526 = vadd.f32 0.0, %v525
        %v527 = vpop.f32.mrb[0].mxu0
        %v528 = vpop.f32.mrb[0].mxu0
        %v529 = vadd.f32 0.0, %v528
        %v530 = vpop.f32.mrb[0].mxu0
        %531 = vmatprep.mubr.bf16.mxu0 0
        %532 = vmatmul.mubr.bf16.gmra.mrb[0].mxu0 %v394
        %v533 = vpop.f32.mrb[0].mxu0
        %v534 = vadd.f32 0.0, %v533
        %v535 = vpop.f32.mrb[0].mxu0
        %v536 = vpop.f32.mrb[0].mxu0
        %v537 = vadd.f32 0.0, %v536
        %v538 = vpop.f32.mrb[0].mxu0
        %539 = vdwg.mxu0
        %p540 = scmp.eq.s32.totalorder %s22, 0
        // Predicated region
        $region83: #{gcn_forward.7} parent=77 // pred_check
          %p541 = pneg %p540
        $region84: #{gcn_forward.7} parent=77 // pred_check_branch
          %543 = sbr.rel (%p541) target = $region86
        $region85: #{gcn_forward.7} parent=77 // pred_region
          %544 = vst [vmem:[#allocation2] sm:$0xff] %v478
          %545 = vst [vmem:[#allocation2 + $0x8] sm:$0xff] %v481
          %546 = vst [vmem:[#allocation2 + $0x10] sm:$0xff] %v486
          %547 = vst [vmem:[#allocation2 + $0x18] sm:$0xff] %v489
          %548 = vst [vmem:[#allocation2 + $0x20] sm:$0xff] %v494
          %549 = vst [vmem:[#allocation2 + $0x28] sm:$0xff] %v497
          %550 = vst [vmem:[#allocation2 + $0x30] sm:$0xff] %v502
          %551 = vst [vmem:[#allocation2 + $0x38] sm:$0xff] %v505
          %552 = vst [vmem:[#allocation2 + $0x40] sm:$0xff] %v510
          %553 = vst [vmem:[#allocation2 + $0x48] sm:$0xff] %v513
          %554 = vst [vmem:[#allocation2 + $0x50] sm:$0xff] %v518
          %555 = vst [vmem:[#allocation2 + $0x58] sm:$0xff] %v521
          %556 = vst [vmem:[#allocation2 + $0x60] sm:$0xff] %v526
          %557 = vst [vmem:[#allocation2 + $0x68] sm:$0xff] %v529
          %558 = vst [vmem:[#allocation2 + $0x70] sm:$0xff] %v534
          %559 = vst [vmem:[#allocation2 + $0x78] sm:$0xff] %v537
        $region86: #{gcn_forward.7} parent=77 // pred_fallthru
          _
        %p560 = scmp.ne.s32.totalorder %s22, 0
        // Predicated region
        $region87: #{gcn_forward.7} parent=77 // pred_check
          %p561 = pneg %p560
        $region88: #{gcn_forward.7} parent=77 // pred_check_branch
          %563 = sbr.rel (%p561) target = $region90
        $region89: #{gcn_forward.7} parent=77 // pred_region
          %v564 = vld [vmem:[#allocation2] sm:$0xff]
          %v565 = vld [vmem:[#allocation2 + $0x8] sm:$0xff]
          %v566 = vld [vmem:[#allocation2 + $0x10] sm:$0xff]
          %v567 = vld [vmem:[#allocation2 + $0x18] sm:$0xff]
          %v568 = vld [vmem:[#allocation2 + $0x20] sm:$0xff]
          %v569 = vld [vmem:[#allocation2 + $0x28] sm:$0xff]
          %v570 = vld [vmem:[#allocation2 + $0x30] sm:$0xff]
          %v571 = vld [vmem:[#allocation2 + $0x38] sm:$0xff]
          %v572 = vld [vmem:[#allocation2 + $0x40] sm:$0xff]
          %v573 = vld [vmem:[#allocation2 + $0x48] sm:$0xff]
          %v574 = vld [vmem:[#allocation2 + $0x50] sm:$0xff]
          %v575 = vld [vmem:[#allocation2 + $0x58] sm:$0xff]
          %v576 = vld [vmem:[#allocation2 + $0x60] sm:$0xff]
          %v577 = vld [vmem:[#allocation2 + $0x68] sm:$0xff]
          %v578 = vld [vmem:[#allocation2 + $0x70] sm:$0xff]
          %v579 = vld [vmem:[#allocation2 + $0x78] sm:$0xff]
          %v580 = vadd.f32 %v564, %v478
          %v581 = vadd.f32 %v565, %v481
          %v582 = vadd.f32 %v566, %v486
          %v583 = vadd.f32 %v567, %v489
          %v584 = vadd.f32 %v568, %v494
          %v585 = vadd.f32 %v569, %v497
          %v586 = vadd.f32 %v570, %v502
          %v587 = vadd.f32 %v571, %v505
          %v588 = vadd.f32 %v572, %v510
          %v589 = vadd.f32 %v573, %v513
          %v590 = vadd.f32 %v574, %v518
          %v591 = vadd.f32 %v575, %v521
          %v592 = vadd.f32 %v576, %v526
          %v593 = vadd.f32 %v577, %v529
          %v594 = vadd.f32 %v578, %v534
          %v595 = vadd.f32 %v579, %v537
          %596 = vst [vmem:[#allocation2] sm:$0xff] %v580
          %597 = vst [vmem:[#allocation2 + $0x8] sm:$0xff] %v581
          %598 = vst [vmem:[#allocation2 + $0x10] sm:$0xff] %v582
          %599 = vst [vmem:[#allocation2 + $0x18] sm:$0xff] %v583
          %600 = vst [vmem:[#allocation2 + $0x20] sm:$0xff] %v584
          %601 = vst [vmem:[#allocation2 + $0x28] sm:$0xff] %v585
          %602 = vst [vmem:[#allocation2 + $0x30] sm:$0xff] %v586
          %603 = vst [vmem:[#allocation2 + $0x38] sm:$0xff] %v587
          %604 = vst [vmem:[#allocation2 + $0x40] sm:$0xff] %v588
          %605 = vst [vmem:[#allocation2 + $0x48] sm:$0xff] %v589
          %606 = vst [vmem:[#allocation2 + $0x50] sm:$0xff] %v590
          %607 = vst [vmem:[#allocation2 + $0x58] sm:$0xff] %v591
          %608 = vst [vmem:[#allocation2 + $0x60] sm:$0xff] %v592
          %609 = vst [vmem:[#allocation2 + $0x68] sm:$0xff] %v593
          %610 = vst [vmem:[#allocation2 + $0x70] sm:$0xff] %v594
          %611 = vst [vmem:[#allocation2 + $0x78] sm:$0xff] %v595
        $region90: #{gcn_forward.7} parent=77 // pred_fallthru
          _
        %p612 = scmp.eq.s32.totalorder %s22, 2
        // Predicated region
        $region91: #{gcn_forward.7} parent=77 // pred_check
          %p613 = pneg %p612
        $region92: #{gcn_forward.7} parent=77 // pred_check_branch
          %615 = sbr.rel (%p613) target = $region94
        $region93: #{gcn_forward.7} parent=77 // pred_region
          %v616 = vld [vmem:[#allocation2] sm:$0xff]
          %v617 = vld [vmem:[#allocation2 + $0x8] sm:$0xff]
          %v618 = vld [vmem:[#allocation2 + $0x10] sm:$0xff]
          %v619 = vld [vmem:[#allocation2 + $0x18] sm:$0xff]
          %v620 = vld [vmem:[#allocation2 + $0x20] sm:$0xff]
          %v621 = vld [vmem:[#allocation2 + $0x28] sm:$0xff]
          %v622 = vld [vmem:[#allocation2 + $0x30] sm:$0xff]
          %v623 = vld [vmem:[#allocation2 + $0x38] sm:$0xff]
          %v624 = vld [vmem:[#allocation2 + $0x40] sm:$0xff]
          %v625 = vld [vmem:[#allocation2 + $0x48] sm:$0xff]
          %v626 = vld [vmem:[#allocation2 + $0x50] sm:$0xff]
          %v627 = vld [vmem:[#allocation2 + $0x58] sm:$0xff]
          %v628 = vld [vmem:[#allocation2 + $0x60] sm:$0xff]
          %v629 = vld [vmem:[#allocation2 + $0x68] sm:$0xff]
          %v630 = vld [vmem:[#allocation2 + $0x70] sm:$0xff]
          %v631 = vld [vmem:[#allocation2 + $0x78] sm:$0xff]
          %v632 = vld [vmem:[%s347] sm:$0xff]
          %v633 = vld [vmem:[%s347 + $0x8] sm:$0xff]
          %v634 = vld [vmem:[%s347 + $0x10] sm:$0xff]
          %v635 = vld [vmem:[%s347 + $0x18] sm:$0xff]
          %v636 = vld [vmem:[%s347 + $0x20] sm:$0xff]
          %v637 = vld [vmem:[%s347 + $0x28] sm:$0xff]
          %v638 = vld [vmem:[%s347 + $0x30] sm:$0xff]
          %v639 = vld [vmem:[%s347 + $0x38] sm:$0xff]
          %v640 = vld [vmem:[%s347 + $0x40] sm:$0xff]
          %v641 = vld [vmem:[%s347 + $0x48] sm:$0xff]
          %v642 = vld [vmem:[%s347 + $0x50] sm:$0xff]
          %v643 = vld [vmem:[%s347 + $0x58] sm:$0xff]
          %v644 = vld [vmem:[%s347 + $0x60] sm:$0xff]
          %v645 = vld [vmem:[%s347 + $0x68] sm:$0xff]
          %v646 = vld [vmem:[%s347 + $0x70] sm:$0xff]
          %v647 = vld [vmem:[%s347 + $0x78] sm:$0xff]
          %649 = vset.pattern.permute.xlu0 0
          %650 = vperm.xlu0 %649, %v632
          %v651 = vpop.permute.xlu0 %650
          %654 = vset.pattern.permute.xlu0 0
          %655 = vperm.xlu0 %654, %v633
          %v656 = vpop.permute.xlu0 %655
          %659 = vset.pattern.permute.xlu0 0
          %660 = vperm.xlu0 %659, %v634
          %v661 = vpop.permute.xlu0 %660
          %664 = vset.pattern.permute.xlu0 0
          %665 = vperm.xlu0 %664, %v635
          %v666 = vpop.permute.xlu0 %665
          %669 = vset.pattern.permute.xlu0 0
          %670 = vperm.xlu0 %669, %v636
          %v671 = vpop.permute.xlu0 %670
          %674 = vset.pattern.permute.xlu0 0
          %675 = vperm.xlu0 %674, %v637
          %v676 = vpop.permute.xlu0 %675
          %679 = vset.pattern.permute.xlu0 0
          %680 = vperm.xlu0 %679, %v638
          %v681 = vpop.permute.xlu0 %680
          %684 = vset.pattern.permute.xlu0 0
          %685 = vperm.xlu0 %684, %v639
          %v686 = vpop.permute.xlu0 %685
          %689 = vset.pattern.permute.xlu0 0
          %690 = vperm.xlu0 %689, %v640
          %v691 = vpop.permute.xlu0 %690
          %694 = vset.pattern.permute.xlu0 0
          %695 = vperm.xlu0 %694, %v641
          %v696 = vpop.permute.xlu0 %695
          %699 = vset.pattern.permute.xlu0 0
          %700 = vperm.xlu0 %699, %v642
          %v701 = vpop.permute.xlu0 %700
          %704 = vset.pattern.permute.xlu0 0
          %705 = vperm.xlu0 %704, %v643
          %v706 = vpop.permute.xlu0 %705
          %709 = vset.pattern.permute.xlu0 0
          %710 = vperm.xlu0 %709, %v644
          %v711 = vpop.permute.xlu0 %710
          %714 = vset.pattern.permute.xlu0 0
          %715 = vperm.xlu0 %714, %v645
          %v716 = vpop.permute.xlu0 %715
          %719 = vset.pattern.permute.xlu0 0
          %720 = vperm.xlu0 %719, %v646
          %v721 = vpop.permute.xlu0 %720
          %724 = vset.pattern.permute.xlu0 0
          %725 = vperm.xlu0 %724, %v647
          %v726 = vpop.permute.xlu0 %725
          %v728 = vmul.f32 %v616, %v651
          %v729 = vmul.f32 %v617, %v656
          %v730 = vmul.f32 %v618, %v661
          %v731 = vmul.f32 %v619, %v666
          %v732 = vmul.f32 %v620, %v671
          %v733 = vmul.f32 %v621, %v676
          %v734 = vmul.f32 %v622, %v681
          %v735 = vmul.f32 %v623, %v686
          %v736 = vmul.f32 %v624, %v691
          %v737 = vmul.f32 %v625, %v696
          %v738 = vmul.f32 %v626, %v701
          %v739 = vmul.f32 %v627, %v706
          %v740 = vmul.f32 %v628, %v711
          %v741 = vmul.f32 %v629, %v716
          %v742 = vmul.f32 %v630, %v721
          %v743 = vmul.f32 %v631, %v726
          %v744 = vld [vmem:[%s353] sm:$0xf]
          %v745 = vld [vmem:[%s353 + $0x4] sm:$0xf]
          %v746 = vld [vmem:[%s353 + $0x8] sm:$0xf]
          %v747 = vld [vmem:[%s353 + $0xc] sm:$0xf]
          %v748 = vld [vmem:[%s353 + $0x10] sm:$0xf]
          %v749 = vld [vmem:[%s353 + $0x14] sm:$0xf]
          %v750 = vld [vmem:[%s353 + $0x18] sm:$0xf]
          %v751 = vld [vmem:[%s353 + $0x1c] sm:$0xf]
          %v752 = vld [vmem:[%s353 + $0x20] sm:$0xf]
          %v753 = vld [vmem:[%s353 + $0x24] sm:$0xf]
          %v754 = vld [vmem:[%s353 + $0x28] sm:$0xf]
          %v755 = vld [vmem:[%s353 + $0x2c] sm:$0xf]
          %v756 = vld [vmem:[%s353 + $0x30] sm:$0xf]
          %v757 = vld [vmem:[%s353 + $0x34] sm:$0xf]
          %v758 = vld [vmem:[%s353 + $0x38] sm:$0xf]
          %v759 = vld [vmem:[%s353 + $0x3c] sm:$0xf]
          %v760 = vunpack.c.l.bf16 %v744
          %v761 = vunpack.c.l.bf16 %v745
          %v762 = vunpack.c.l.bf16 %v746
          %v763 = vunpack.c.l.bf16 %v747
          %v764 = vunpack.c.l.bf16 %v748
          %v765 = vunpack.c.l.bf16 %v749
          %v766 = vunpack.c.l.bf16 %v750
          %v767 = vunpack.c.l.bf16 %v751
          %v768 = vunpack.c.l.bf16 %v752
          %v769 = vunpack.c.l.bf16 %v753
          %v770 = vunpack.c.l.bf16 %v754
          %v771 = vunpack.c.l.bf16 %v755
          %v772 = vunpack.c.l.bf16 %v756
          %v773 = vunpack.c.l.bf16 %v757
          %v774 = vunpack.c.l.bf16 %v758
          %v775 = vunpack.c.l.bf16 %v759
          %v776 = vadd.f32 %v728, %v760
          %v777 = vadd.f32 %v729, %v761
          %v778 = vadd.f32 %v730, %v762
          %v779 = vadd.f32 %v731, %v763
          %v780 = vadd.f32 %v732, %v764
          %v781 = vadd.f32 %v733, %v765
          %v782 = vadd.f32 %v734, %v766
          %v783 = vadd.f32 %v735, %v767
          %v784 = vadd.f32 %v736, %v768
          %v785 = vadd.f32 %v737, %v769
          %v786 = vadd.f32 %v738, %v770
          %v787 = vadd.f32 %v739, %v771
          %v788 = vadd.f32 %v740, %v772
          %v789 = vadd.f32 %v741, %v773
          %v790 = vadd.f32 %v742, %v774
          %v791 = vadd.f32 %v743, %v775
          %v792 = vld [vmem:[%s4] sm:$0x1]
          %v794 = vlaneseq
          %v795 = vshrl.u32 %v794, 7
          %v796 = vsub.s32 0, %v795
          %v797 = vrot.slane %v792, %v796
          %v799 = vmul.f32 %v776, %v797
          %v800 = vmul.f32 %v777, %v797
          %v801 = vmul.f32 %v778, %v797
          %v802 = vmul.f32 %v779, %v797
          %v803 = vmul.f32 %v780, %v797
          %v804 = vmul.f32 %v781, %v797
          %v805 = vmul.f32 %v782, %v797
          %v806 = vmul.f32 %v783, %v797
          %v807 = vmul.f32 %v784, %v797
          %v808 = vmul.f32 %v785, %v797
          %v809 = vmul.f32 %v786, %v797
          %v810 = vmul.f32 %v787, %v797
          %v811 = vmul.f32 %v788, %v797
          %v812 = vmul.f32 %v789, %v797
          %v813 = vmul.f32 %v790, %v797
          %v814 = vmul.f32 %v791, %v797
          %v815 = vld [vmem:[%s5] sm:$0x1]
          %v817 = vlaneseq
          %v818 = vshrl.u32 %v817, 7
          %v819 = vsub.s32 0, %v818
          %v820 = vrot.slane %v815, %v819
          %v822 = vadd.f32 %v799, %v820
          %v823 = vadd.f32 %v800, %v820
          %v824 = vadd.f32 %v801, %v820
          %v825 = vadd.f32 %v802, %v820
          %v826 = vadd.f32 %v803, %v820
          %v827 = vadd.f32 %v804, %v820
          %v828 = vadd.f32 %v805, %v820
          %v829 = vadd.f32 %v806, %v820
          %v830 = vadd.f32 %v807, %v820
          %v831 = vadd.f32 %v808, %v820
          %v832 = vadd.f32 %v809, %v820
          %v833 = vadd.f32 %v810, %v820
          %v834 = vadd.f32 %v811, %v820
          %v835 = vadd.f32 %v812, %v820
          %v836 = vadd.f32 %v813, %v820
          %v837 = vadd.f32 %v814, %v820
          %v838 = vmax.f32 %v822, 0.0
          %v839 = vmax.f32 %v823, 0.0
          %v840 = vmax.f32 %v824, 0.0
          %v841 = vmax.f32 %v825, 0.0
          %v842 = vmax.f32 %v826, 0.0
          %v843 = vmax.f32 %v827, 0.0
          %v844 = vmax.f32 %v828, 0.0
          %v845 = vmax.f32 %v829, 0.0
          %v846 = vmax.f32 %v830, 0.0
          %v847 = vmax.f32 %v831, 0.0
          %v848 = vmax.f32 %v832, 0.0
          %v849 = vmax.f32 %v833, 0.0
          %v850 = vmax.f32 %v834, 0.0
          %v851 = vmax.f32 %v835, 0.0
          %v852 = vmax.f32 %v836, 0.0
          %v853 = vmax.f32 %v837, 0.0
          %v854 = vpack.c.bf16 %v839, %v838
          %v855 = vpack.c.bf16 %v841, %v840
          %v856 = vpack.c.bf16 %v843, %v842
          %v857 = vpack.c.bf16 %v845, %v844
          %v858 = vpack.c.bf16 %v847, %v846
          %v859 = vpack.c.bf16 %v849, %v848
          %v860 = vpack.c.bf16 %v851, %v850
          %v861 = vpack.c.bf16 %v853, %v852
          %v870 = vunpack.c.l.b16 %v854
          %v871 = vunpack.c.h.b16 %v854
          %v872 = vunpack.c.l.b16 %v855
          %v873 = vunpack.c.h.b16 %v855
          %v874 = vunpack.c.l.b16 %v856
          %v875 = vunpack.c.h.b16 %v856
          %v876 = vunpack.c.l.b16 %v857
          %v877 = vunpack.c.h.b16 %v857
          %v878 = vunpack.c.l.b16 %v858
          %v879 = vunpack.c.h.b16 %v858
          %v880 = vunpack.c.l.b16 %v859
          %v881 = vunpack.c.h.b16 %v859
          %v882 = vunpack.c.l.b16 %v860
          %v883 = vunpack.c.h.b16 %v860
          %v884 = vunpack.c.l.b16 %v861
          %v885 = vunpack.c.h.b16 %v861
          %v886 = vpack.c.b16 %v870, %v870
          %v887 = vpack.c.b16 %v871, %v871
          %v888 = vpack.c.b16 %v872, %v872
          %v889 = vpack.c.b16 %v873, %v873
          %v890 = vpack.c.b16 %v874, %v874
          %v891 = vpack.c.b16 %v875, %v875
          %v892 = vpack.c.b16 %v876, %v876
          %v893 = vpack.c.b16 %v877, %v877
          %v894 = vpack.c.b16 %v878, %v878
          %v895 = vpack.c.b16 %v879, %v879
          %v896 = vpack.c.b16 %v880, %v880
          %v897 = vpack.c.b16 %v881, %v881
          %v898 = vpack.c.b16 %v882, %v882
          %v899 = vpack.c.b16 %v883, %v883
          %v900 = vpack.c.b16 %v884, %v884
          %v901 = vpack.c.b16 %v885, %v885
          %918 = vst [vmem:[%s359] sm:$0xf] %v886
          %919 = vst [vmem:[%s359 + $0x4] sm:$0xf] %v887
          %920 = vst [vmem:[%s359 + $0x8] sm:$0xf] %v888
          %921 = vst [vmem:[%s359 + $0xc] sm:$0xf] %v889
          %922 = vst [vmem:[%s359 + $0x10] sm:$0xf] %v890
          %923 = vst [vmem:[%s359 + $0x14] sm:$0xf] %v891
          %924 = vst [vmem:[%s359 + $0x18] sm:$0xf] %v892
          %925 = vst [vmem:[%s359 + $0x1c] sm:$0xf] %v893
          %926 = vst [vmem:[%s359 + $0x20] sm:$0xf] %v894
          %927 = vst [vmem:[%s359 + $0x24] sm:$0xf] %v895
          %928 = vst [vmem:[%s359 + $0x28] sm:$0xf] %v896
          %929 = vst [vmem:[%s359 + $0x2c] sm:$0xf] %v897
          %930 = vst [vmem:[%s359 + $0x30] sm:$0xf] %v898
          %931 = vst [vmem:[%s359 + $0x34] sm:$0xf] %v899
          %932 = vst [vmem:[%s359 + $0x38] sm:$0xf] %v900
          %933 = vst [vmem:[%s359 + $0x3c] sm:$0xf] %v901
        $region94: #{gcn_forward.7} parent=77 // pred_fallthru
          _
        %s934 = smul.u32 16, %s21
        %p935 = scmp.lt.s32.totalorder %s934, 47
        %s936 = scalar_select %p935, %s934, 47
        %s937 = smul.addr %s936, 4
        %s938 = scalar_lea.vmem %s6, %s937
        // Predicated region
        $region95: #{gcn_forward.7} parent=77 // pred_check
          %p939 = pneg %p190
        $region96: #{gcn_forward.7} parent=77 // pred_check_branch
          %941 = sbr.rel (%p939) target = $region98
        $region97: #{gcn_forward.7} parent=77 // pred_region
          %s942 = smul.u32 16, %s21
        $region98: #{gcn_forward.7} parent=77 // pred_fallthru
          _
      $region78: #{gcn_forward.7} parent=5 // pred_fallthru
        _
      %p943 = scmp.le.s32.totalorder 2, %s12
      // Predicated region
      $region99: #{gcn_forward.7} parent=5 // pred_check
        %p944 = pneg %p943
      $region100: #{gcn_forward.7} parent=5 // pred_check_branch
        %946 = sbr.rel (%p944) target = $region102
      $region101: #{gcn_forward.7} parent=5 // pred_region
        %s947 = ssub.s32 %s12, 2
        // Predicated region
        $region103: #{gcn_forward.7} parent=101 // pred_check
          %p948 = pneg %p196
        $region104: #{gcn_forward.7} parent=101 // pred_check_branch
          %950 = sbr.rel (%p948) target = $region106
        $region105: #{gcn_forward.7} parent=101 // pred_region
          %s951 = smul.u32 16, %s23
          %p952 = scmp.lt.s32.totalorder %s951, 47
          %s953 = scalar_select %p952, %s951, 47
          %s954 = smul.addr %s953, 4
          %s955 = scalar_lea.vmem %s6, %s954
        $region106: #{gcn_forward.7} parent=101 // pred_fallthru
          _
      $region102: #{gcn_forward.7} parent=5 // pred_fallthru
        _
    $region6: #{gcn_forward.7} parent=1 // loop_footer
      %s16 = sadd.s32 1, %s12
    $region7: #{gcn_forward.7} parent=1 // loop_footer_branch
      %11 = sbr.rel target = $region3
    $region8: #{gcn_forward.7} parent=1 // loop_exit
      _

// kernel: gcn_forward.11
$region0: #{gcn_forward.11}
  #allocation0 [shape = 'u32[]', space=smem, size = 0x4, offset = 0x4, fixed_abs, tag = 'smem constant byte address 0x4 - core index']
  #allocation1 [shape = 'u32[144,128]{1,0:T(1,128)}', space=vmem, size = 0x12000, scoped, tag = 'internal scratch']
  #allocation2 [shape = 'f32[128,128]{1,0:T(8,128)}', space=vmem, size = 0x10000, scoped, tag = 'scratch operand']
  %s0 = inlined_call_operand.vmem [shape: s8[384,384], index: 0, kind: input, shape index: {}]
  %s1 = inlined_call_operand.vmem [shape: bf16[384,128], index: 1, kind: input, shape index: {}]
  %s2 = inlined_call_operand.vmem [shape: f32[384,1], index: 2, kind: input, shape index: {}]
  %s3 = inlined_call_operand.vmem [shape: bf16[384,128], index: 3, kind: input, shape index: {}]
  %s4 = inlined_call_operand.vmem [shape: f32[1,128], index: 4, kind: input, shape index: {}]
  %s5 = inlined_call_operand.vmem [shape: f32[384,128], index: 5, kind: output, shape index: {}]
  %s6 = sld [smem:[#allocation0]]
  $region103: #{gcn_forward.11} parent=0
    _
  %s8 = ssub.s32 1, %s6
  %s9 = scalar_select 0, %s8, %s6
  $region1: #{gcn_forward.11} parent=0
    #allocation3 [shape = 'u8[32768]{0}', space=vmem, size = 0x8000, scoped, tag = 'input window, operand 0']
    loop: start=0, step=1, limit=11
    $region2: #{gcn_forward.11} parent=1 // loop_pre_header
      _
    $region3: #{gcn_forward.11} parent=1 // loop_header
      %s11 = sphi 0, %s15
      %p12 = scmp.ge.s32.totalorder %s11, 11
      %s18 = sphi 0, %s30
      %s19 = sphi 0, %s26
      %s20 = sphi 0, %s18
      %s21 = sphi 0, %s19
      %s22 = sphi 0, %s20
      %s23 = sphi 0, %s21
      %s35 = sphi 0, %s37
      %s38 = sphi 0, %s35
      %s39 = sphi 0, %s38
      %s55 = sphi 0, %s39
      %s59 = sphi 0, %s59
      %s61 = sphi 0, %s59
      %s62 = sphi 0, %s61
      %s76 = sphi 0, %s62
      %s82 = sphi 0, %s84
      %s85 = sphi 0, %s82
      %s86 = sphi 0, %s85
      %s102 = sphi 0, %s86
      %s108 = sphi 0, %s110
      %s111 = sphi 0, %s108
      %s112 = sphi 0, %s111
      %s128 = sphi 0, %s112
      %s132 = sphi 0, %s132
      %s134 = sphi 0, %s132
      %s135 = sphi 0, %s134
      %s149 = sphi 0, %s135
      %s155 = sphi 0, %s157
      %s158 = sphi 0, %s155
      %s159 = sphi 0, %s158
      %s175 = sphi 0, %s159
    $region4: #{gcn_forward.11} parent=1 // loop_header_branch
      %14 = sbr.rel (%p12) target = $region8
    $region5: #{gcn_forward.11} parent=1 // loop_body
      %s16 = ssub.s32 %s11, 1
      %s17 = ssub.s32 %s11, 2
      %s24 = sadd.s32 1, %s19
      %p25 = scmp.ge.s32.totalorder %s24, 3
      %s26 = scalar_select %p25, 0, %s24
      %s27 = sadd.s32 1, %s18
      %s28 = scalar_select %p25, %s27, %s18
      %p29 = scmp.ge.s32.totalorder %s28, 3
      %s30 = scalar_select %p29, 0, %s28
      %s31 = ssub.s32 %s18, %s30
      %s32 = ssub.s32 %s19, %s26
      %s33 = sor.u32 %s31, %s32
      %p34 = scmp.eq.s32.totalorder %s33, 0
      %s36 = sadd.s32 %s35, 1
      %s37 = scalar_select %p34, %s35, %s36
      %p40 = pneg %p34
      %p41 = scmp.eq.s32.totalorder %s11, 8
      %p42 = por %p40, %p41
      %p43 = scmp.ne.s32.totalorder %s35, %s38
      %p44 = scmp.eq.s32.totalorder %s11, 0
      %p45 = por %p43, %p44
      %p46 = scmp.ne.s32.totalorder %s35, %s38
      %p47 = scmp.eq.s32.totalorder %s16, 8
      %p48 = por %p46, %p47
      %p49 = scmp.ne.s32.totalorder %s38, %s39
      %p50 = scmp.eq.s32.totalorder %s16, 0
      %p51 = por %p49, %p50
      %p52 = scmp.ne.s32.totalorder %s38, %s39
      %p53 = scmp.eq.s32.totalorder %s17, 8
      %p54 = por %p52, %p53
      %p56 = scmp.ne.s32.totalorder %s39, %s55
      %p57 = scmp.eq.s32.totalorder %s17, 0
      %p58 = por %p56, %p57
      %s60 = sadd.s32 %s59, 1
      %p63 = scmp.eq.s32.totalorder %s11, 8
      %p64 = scmp.ne.s32.totalorder %s59, %s61
      %p65 = scmp.eq.s32.totalorder %s11, 0
      %p66 = por %p64, %p65
      %p67 = scmp.ne.s32.totalorder %s59, %s61
      %p68 = scmp.eq.s32.totalorder %s16, 8
      %p69 = por %p67, %p68
      %p70 = scmp.ne.s32.totalorder %s61, %s62
      %p71 = scmp.eq.s32.totalorder %s16, 0
      %p72 = por %p70, %p71
      %p73 = scmp.ne.s32.totalorder %s61, %s62
      %p74 = scmp.eq.s32.totalorder %s17, 8
      %p75 = por %p73, %p74
      %p77 = scmp.ne.s32.totalorder %s62, %s76
      %p78 = scmp.eq.s32.totalorder %s17, 0
      %p79 = por %p77, %p78
      %s80 = ssub.s32 %s18, %s30
      %p81 = scmp.eq.s32.totalorder %s80, 0
      %s83 = sadd.s32 %s82, 1
      %s84 = scalar_select %p81, %s82, %s83
      %p87 = pneg %p81
      %p88 = scmp.eq.s32.totalorder %s11, 8
      %p89 = por %p87, %p88
      %p90 = scmp.ne.s32.totalorder %s82, %s85
      %p91 = scmp.eq.s32.totalorder %s11, 0
      %p92 = por %p90, %p91
      %p93 = scmp.ne.s32.totalorder %s82, %s85
      %p94 = scmp.eq.s32.totalorder %s16, 8
      %p95 = por %p93, %p94
      %p96 = scmp.ne.s32.totalorder %s85, %s86
      %p97 = scmp.eq.s32.totalorder %s16, 0
      %p98 = por %p96, %p97
      %p99 = scmp.ne.s32.totalorder %s85, %s86
      %p100 = scmp.eq.s32.totalorder %s17, 8
      %p101 = por %p99, %p100
      %p103 = scmp.ne.s32.totalorder %s86, %s102
      %p104 = scmp.eq.s32.totalorder %s17, 0
      %p105 = por %p103, %p104
      %s106 = ssub.s32 %s18, %s30
      %p107 = scmp.eq.s32.totalorder %s106, 0
      %s109 = sadd.s32 %s108, 1
      %s110 = scalar_select %p107, %s108, %s109
      %p113 = pneg %p107
      %p114 = scmp.eq.s32.totalorder %s11, 8
      %p115 = por %p113, %p114
      %p116 = scmp.ne.s32.totalorder %s108, %s111
      %p117 = scmp.eq.s32.totalorder %s11, 0
      %p118 = por %p116, %p117
      %p119 = scmp.ne.s32.totalorder %s108, %s111
      %p120 = scmp.eq.s32.totalorder %s16, 8
      %p121 = por %p119, %p120
      %p122 = scmp.ne.s32.totalorder %s111, %s112
      %p123 = scmp.eq.s32.totalorder %s16, 0
      %p124 = por %p122, %p123
      %p125 = scmp.ne.s32.totalorder %s111, %s112
      %p126 = scmp.eq.s32.totalorder %s17, 8
      %p127 = por %p125, %p126
      %p129 = scmp.ne.s32.totalorder %s112, %s128
      %p130 = scmp.eq.s32.totalorder %s17, 0
      %p131 = por %p129, %p130
      %s133 = sadd.s32 %s132, 1
      %p136 = scmp.eq.s32.totalorder %s11, 8
      %p137 = scmp.ne.s32.totalorder %s132, %s134
      %p138 = scmp.eq.s32.totalorder %s11, 0
      %p139 = por %p137, %p138
      %p140 = scmp.ne.s32.totalorder %s132, %s134
      %p141 = scmp.eq.s32.totalorder %s16, 8
      %p142 = por %p140, %p141
      %p143 = scmp.ne.s32.totalorder %s134, %s135
      %p144 = scmp.eq.s32.totalorder %s16, 0
      %p145 = por %p143, %p144
      %p146 = scmp.ne.s32.totalorder %s134, %s135
      %p147 = scmp.eq.s32.totalorder %s17, 8
      %p148 = por %p146, %p147
      %p150 = scmp.ne.s32.totalorder %s135, %s149
      %p151 = scmp.eq.s32.totalorder %s17, 0
      %p152 = por %p150, %p151
      %s153 = ssub.s32 %s18, %s30
      %p154 = scmp.eq.s32.totalorder %s153, 0
      %s156 = sadd.s32 %s155, 1
      %s157 = scalar_select %p154, %s155, %s156
      %p160 = pneg %p154
      %p161 = scmp.eq.s32.totalorder %s11, 8
      %p162 = por %p160, %p161
      %p163 = scmp.ne.s32.totalorder %s155, %s158
      %p164 = scmp.eq.s32.totalorder %s11, 0
      %p165 = por %p163, %p164
      %p166 = scmp.ne.s32.totalorder %s155, %s158
      %p167 = scmp.eq.s32.totalorder %s16, 8
      %p168 = por %p166, %p167
      %p169 = scmp.ne.s32.totalorder %s158, %s159
      %p170 = scmp.eq.s32.totalorder %s16, 0
      %p171 = por %p169, %p170
      %p172 = scmp.ne.s32.totalorder %s158, %s159
      %p173 = scmp.eq.s32.totalorder %s17, 8
      %p174 = por %p172, %p173
      %p176 = scmp.ne.s32.totalorder %s159, %s175
      %p177 = scmp.eq.s32.totalorder %s17, 0
      %p178 = por %p176, %p177
      %p179 = scmp.le.s32.totalorder 1, %s11
      %p180 = scmp.lt.s32.totalorder %s11, 10
      %p181 = pnand %p179, %p180
      %p182 = pneg %p181
      // Predicated region
      $region9: #{gcn_forward.11} parent=5 // pred_check
        _
      $region10: #{gcn_forward.11} parent=5 // pred_check_branch
        %184 = sbr.rel (%p181) target = $region12
      $region11: #{gcn_forward.11} parent=5 // pred_region
        %s185 = ssub.s32 %s11, 1
        // Predicated region
        $region13: #{gcn_forward.11} parent=11 // pred_check
          %p186 = pneg %p72
        $region14: #{gcn_forward.11} parent=11 // pred_check_branch
          %188 = sbr.rel (%p186) target = $region16
        $region15: #{gcn_forward.11} parent=11 // pred_region
          _
        $region16: #{gcn_forward.11} parent=11 // pred_fallthru
          _
        // Predicated region
        $region17: #{gcn_forward.11} parent=11 // pred_check
          %p189 = pneg %p145
        $region18: #{gcn_forward.11} parent=11 // pred_check_branch
          %191 = sbr.rel (%p189) target = $region20
        $region19: #{gcn_forward.11} parent=11 // pred_region
          _
        $region20: #{gcn_forward.11} parent=11 // pred_fallthru
          _
      $region12: #{gcn_forward.11} parent=5 // pred_fallthru
        _
      %p192 = scmp.lt.s32.totalorder %s11, 9
      // Predicated region
      $region21: #{gcn_forward.11} parent=5 // pred_check
        %p193 = pneg %p192
      $region22: #{gcn_forward.11} parent=5 // pred_check_branch
        %195 = sbr.rel (%p193) target = $region24
      $region23: #{gcn_forward.11} parent=5 // pred_region
        // Predicated region
        $region25: #{gcn_forward.11} parent=23 // pred_check
          %p196 = pneg %p45
        $region26: #{gcn_forward.11} parent=23 // pred_check_branch
          %198 = sbr.rel (%p196) target = $region28
        $region27: #{gcn_forward.11} parent=23 // pred_region
          %s199 = sand.u32 %s35, 1
          %s200 = sand.u32 %s35, 1
          %s201 = smul.addr %s200, 32
          %s202 = scalar_lea.vmem [#allocation3], %s201
          %s203 = smul.u32 4, %s18
          %s204 = smul.addr %s203, 3
          %s205 = sadd.s32 %s19, %s204
          %s206 = smul.addr %s205, 8
          %s207 = scalar_lea.vmem %s0, %s206
          // Predicated region
          $region29: #{gcn_forward.11} parent=27 // pred_check
            _
          $region30: #{gcn_forward.11} parent=27 // pred_check_branch
            %209 = sbr.rel (0) target = $region32
          $region31: #{gcn_forward.11} parent=27 // pred_region
            // Predicated region
            $region33: #{gcn_forward.11} parent=31 // pred_check
              _
            $region34: #{gcn_forward.11} parent=31 // pred_check_branch
              %211 = sbr.rel (0) target = $region36
            $region35: #{gcn_forward.11} parent=31 // pred_region
              // Predicated region
              $region48: #{gcn_forward.11} parent=35 // pred_check
                _
              $region49: #{gcn_forward.11} parent=35 // pred_check_branch
                %232 = sbr.rel (0) target = $region51
              $region50: #{gcn_forward.11} parent=35 // pred_region
                loop: start=0, step=1, limit=1
                $region52: #{gcn_forward.11} parent=50 // loop_pre_header
                  _
                $region53: #{gcn_forward.11} parent=50 // loop_header
                  %s234 = sphi 0, %s238
                  %p235 = scmp.ge.s32.totalorder %s234, 1
                  %s239 = sphi %s207, %s207
                  %s240 = sphi %s202, %s202
                $region54: #{gcn_forward.11} parent=50 // loop_header_branch
                  %237 = sbr.rel (%p235) target = $region58
                $region55: #{gcn_forward.11} parent=50 // loop_body
                  %v241 = vld [vmem:[%s239] sm:$0xff]
                  %242 = vst [vmem:[%s240] sm:$0xff] %v241
                  %v243 = vld [vmem:[%s239 + $0x18] sm:$0xff]
                  %244 = vst [vmem:[%s240 + $0x8] sm:$0xff] %v243
                  %v245 = vld [vmem:[%s239 + $0x30] sm:$0xff]
                  %246 = vst [vmem:[%s240 + $0x10] sm:$0xff] %v245
                  %v247 = vld [vmem:[%s239 + $0x48] sm:$0xff]
                  %248 = vst [vmem:[%s240 + $0x18] sm:$0xff] %v247
                $region56: #{gcn_forward.11} parent=50 // loop_footer
                  %s238 = sadd.s32 1, %s234
                $region57: #{gcn_forward.11} parent=50 // loop_footer_branch
                  %233 = sbr.rel target = $region53
                $region58: #{gcn_forward.11} parent=50 // loop_exit
                  _
              $region51: #{gcn_forward.11} parent=35 // pred_fallthru
                _
              // Predicated region
              $region59: #{gcn_forward.11} parent=35 // pred_check
                _
              $region60: #{gcn_forward.11} parent=35 // pred_check_branch
                %250 = sbr.rel target = $region62
              $region61: #{gcn_forward.11} parent=35 // pred_region
                _
              $region62: #{gcn_forward.11} parent=35 // pred_fallthru
                _
            $region36: #{gcn_forward.11} parent=31 // pred_fallthru
              _
            // Predicated region
            $region37: #{gcn_forward.11} parent=31 // pred_check
              _
            $region38: #{gcn_forward.11} parent=31 // pred_check_branch
              %213 = sbr.rel target = $region40
            $region39: #{gcn_forward.11} parent=31 // pred_region
              loop: start=0, step=1, limit=1
              $region41: #{gcn_forward.11} parent=39 // loop_pre_header
                _
              $region42: #{gcn_forward.11} parent=39 // loop_header
                %s216 = sphi 0, %s220
                %p217 = scmp.ge.s32.totalorder %s216, 1
                %s221 = sphi %s207, %s207
                %s222 = sphi %s202, %s202
              $region43: #{gcn_forward.11} parent=39 // loop_header_branch
                %219 = sbr.rel (%p217) target = $region47
              $region44: #{gcn_forward.11} parent=39 // loop_body
                %v223 = vld [vmem:[%s221] sm:$0xff]
                %224 = vst [vmem:[%s222] sm:$0xff] %v223
                %v225 = vld [vmem:[%s221 + $0x18] sm:$0xff]
                %226 = vst [vmem:[%s222 + $0x8] sm:$0xff] %v225
                %v227 = vld [vmem:[%s221 + $0x30] sm:$0xff]
                %228 = vst [vmem:[%s222 + $0x10] sm:$0xff] %v227
                %v229 = vld [vmem:[%s221 + $0x48] sm:$0xff]
                %230 = vst [vmem:[%s222 + $0x18] sm:$0xff] %v229
              $region45: #{gcn_forward.11} parent=39 // loop_footer
                %s220 = sadd.s32 1, %s216
              $region46: #{gcn_forward.11} parent=39 // loop_footer_branch
                %215 = sbr.rel target = $region42
              $region47: #{gcn_forward.11} parent=39 // loop_exit
                _
            $region40: #{gcn_forward.11} parent=31 // pred_fallthru
              _
          $region32: #{gcn_forward.11} parent=27 // pred_fallthru
            _
          %251 = vnop
        $region28: #{gcn_forward.11} parent=23 // pred_fallthru
          _
        // Predicated region
        $region63: #{gcn_forward.11} parent=23 // pred_check
          %p252 = pneg %p92
        $region64: #{gcn_forward.11} parent=23 // pred_check_branch
          %254 = sbr.rel (%p252) target = $region66
        $region65: #{gcn_forward.11} parent=23 // pred_region
          %s255 = smul.u32 16, %s18
          %p256 = scmp.lt.s32.totalorder %s255, 47
          %s257 = scalar_select %p256, %s255, 47
          %s258 = smul.addr %s257, 8
          %s259 = scalar_lea.vmem %s2, %s258
          %s260 = smul.u32 16, %s18
        $region66: #{gcn_forward.11} parent=23 // pred_fallthru
          _
        // Predicated region
        $region67: #{gcn_forward.11} parent=23 // pred_check
          %p261 = pneg %p118
        $region68: #{gcn_forward.11} parent=23 // pred_check_branch
          %263 = sbr.rel (%p261) target = $region70
        $region69: #{gcn_forward.11} parent=23 // pred_region
          %s264 = smul.u32 16, %s18
          %p265 = scmp.lt.s32.totalorder %s264, 47
          %s266 = scalar_select %p265, %s264, 47
          %s267 = smul.addr %s266, 4
          %s268 = scalar_lea.vmem %s3, %s267
          %s269 = smul.u32 16, %s18
        $region70: #{gcn_forward.11} parent=23 // pred_fallthru
          _
      $region24: #{gcn_forward.11} parent=5 // pred_fallthru
        _
      %p270 = scmp.le.s32.totalorder 1, %s11
      %p271 = scmp.lt.s32.totalorder %s11, 10
      %p272 = pnand %p270, %p271
      %p273 = pneg %p272
      // Predicated region
      $region71: #{gcn_forward.11} parent=5 // pred_check
        _
      $region72: #{gcn_forward.11} parent=5 // pred_check_branch
        %275 = sbr.rel (%p272) target = $region74
      $region73: #{gcn_forward.11} parent=5 // pred_region
        %s276 = ssub.s32 %s11, 1
        %s277 = sand.u32 %s38, 1
        %s278 = sand.u32 %s38, 1
        %s279 = smul.addr %s278, 32
        %s280 = scalar_lea.vmem [#allocation3], %s279
        // Predicated region
        $region75: #{gcn_forward.11} parent=73 // pred_check
          %p281 = pneg %p51
        $region76: #{gcn_forward.11} parent=73 // pred_check_branch
          %283 = sbr.rel (%p281) target = $region78
        $region77: #{gcn_forward.11} parent=73 // pred_region
          _
        $region78: #{gcn_forward.11} parent=73 // pred_fallthru
          _
        %s284 = sand.u32 %s38, 1
        %s285 = sand.u32 %s38, 1
        %s286 = smul.addr %s285, 32
        %s287 = scalar_lea.vmem [#allocation3], %s286
        %p288 = pneg %p51
        %p289 = pneg %p48
        %p290 = pneg %p72
        %p291 = pneg %p69
        %s292 = smul.u32 16, %s20
        %p293 = scmp.lt.s32.totalorder %s292, 47
        %s294 = scalar_select %p293, %s292, 47
        %s295 = smul.addr %s294, 8
        %s296 = scalar_lea.vmem %s2, %s295
        %p297 = pneg %p98
        %p298 = pneg %p95
        %s299 = smul.u32 16, %s20
        %p300 = scmp.lt.s32.totalorder %s299, 47
        %s301 = scalar_select %p300, %s299, 47
        %s302 = smul.addr %s301, 4
        %s303 = scalar_lea.vmem %s3, %s302
        %p304 = pneg %p124
        %p305 = pneg %p121
        %p306 = pneg %p145
        %p307 = pneg %p142
        %p308 = pneg %p171
        %p309 = pneg %p168
        %s310 = smul.u32 16, %s20
        %p311 = scmp.lt.s32.totalorder %s310, 47
        %s312 = scalar_select %p311, %s310, 47
        %s313 = smul.addr %s312, 8
        %s314 = scalar_lea.vmem %s5, %s313
        %s315 = smul.u32 4, %s20
        %s316 = smul.u32 16, %s20
        %p317 = scmp.lt.s32.totalorder %s316, 47
        %s318 = scalar_select %p317, %s316, 47
        %s319 = smul.addr %s318, 8
        %s320 = scalar_lea.vmem %s2, %s319
        %s321 = smul.u32 16, %s20
        %s322 = smul.u32 16, %s20
        %p323 = scmp.lt.s32.totalorder %s322, 47
        %s324 = scalar_select %p323, %s322, 47
        %s325 = smul.addr %s324, 4
        %s326 = scalar_lea.vmem %s3, %s325
        %s327 = smul.u32 16, %s20
        %s328 = smul.u32 16, %s20
        %p329 = scmp.lt.s32.totalorder %s328, 47
        %s330 = scalar_select %p329, %s328, 47
        %s331 = smul.addr %s330, 8
        %s332 = scalar_lea.vmem %s5, %s331
        %s333 = smul.u32 16, %s20
        %s335 = smul.u32 %s21, 128
        %s336 = sshra.s32 %s335, 3
        %s337 = sand.u32 %s335, 7
        %s338 = smul.addr %s336, 4
        %s339 = scalar_lea.vmem %s1, %s338
        %v340 = vld [vmem:[%s339] sm:$0xf]
        %v341 = vld [vmem:[%s339 + $0x4] sm:$0xf]
        %v342 = vld [vmem:[%s339 + $0x8] sm:$0xf]
        %v343 = vld [vmem:[%s339 + $0xc] sm:$0xf]
        %v344 = vld [vmem:[%s339 + $0x10] sm:$0xf]
        %v345 = vld [vmem:[%s339 + $0x14] sm:$0xf]
        %v346 = vld [vmem:[%s339 + $0x18] sm:$0xf]
        %v347 = vld [vmem:[%s339 + $0x1c] sm:$0xf]
        %v348 = vld [vmem:[%s339 + $0x20] sm:$0xf]
        %v349 = vld [vmem:[%s339 + $0x24] sm:$0xf]
        %v350 = vld [vmem:[%s339 + $0x28] sm:$0xf]
        %v351 = vld [vmem:[%s339 + $0x2c] sm:$0xf]
        %v352 = vld [vmem:[%s339 + $0x30] sm:$0xf]
        %v353 = vld [vmem:[%s339 + $0x34] sm:$0xf]
        %v354 = vld [vmem:[%s339 + $0x38] sm:$0xf]
        %v355 = vld [vmem:[%s339 + $0x3c] sm:$0xf]
        %v356 = vld [vmem:[%s280] sm:$0xff]
        %v357 = vld [vmem:[%s280 + $0x8] sm:$0xff]
        %v358 = vld [vmem:[%s280 + $0x10] sm:$0xff]
        %v359 = vld [vmem:[%s280 + $0x18] sm:$0xff]
        %v360 = vunpack.c.l.s8.bf16 %v356
        %v361 = vunpack.c.h.s8.bf16 %v356
        %v362 = vunpack.c.l.s8.bf16 %v357
        %v363 = vunpack.c.h.s8.bf16 %v357
        %v364 = vunpack.c.l.s8.bf16 %v358
        %v365 = vunpack.c.h.s8.bf16 %v358
        %v366 = vunpack.c.l.s8.bf16 %v359
        %v367 = vunpack.c.h.s8.bf16 %v359
        %v384 = vunpack.c.l.b16 %v340
        %v385 = vunpack.c.l.b16 %v341
        %v386 = vunpack.c.l.b16 %v342
        %v387 = vunpack.c.l.b16 %v343
        %v388 = vunpack.c.l.b16 %v344
        %v389 = vunpack.c.l.b16 %v345
        %v390 = vunpack.c.l.b16 %v346
        %v391 = vunpack.c.l.b16 %v347
        %v392 = vunpack.c.l.b16 %v348
        %v393 = vunpack.c.l.b16 %v349
        %v394 = vunpack.c.l.b16 %v350
        %v395 = vunpack.c.l.b16 %v351
        %v396 = vunpack.c.l.b16 %v352
        %v397 = vunpack.c.l.b16 %v353
        %v398 = vunpack.c.l.b16 %v354
        %v399 = vunpack.c.l.b16 %v355
        %v400 = vpack.c.b16 %v385, %v384
        %v401 = vpack.c.b16 %v387, %v386
        %v402 = vpack.c.b16 %v389, %v388
        %v403 = vpack.c.b16 %v391, %v390
        %v404 = vpack.c.b16 %v393, %v392
        %v405 = vpack.c.b16 %v395, %v394
        %v406 = vpack.c.b16 %v397, %v396
        %v407 = vpack.c.b16 %v399, %v398
        %416 = vmatprep.subr.bf16.mxu0 0
        %417 = vmatpush1.bf16.msra.mxu0 %v400
        %418 = vmatprep.subr.bf16.mxu0 0
        %419 = vmatpush1.bf16.msra.mxu0 %v401
        %420 = vmatprep.subr.bf16.mxu0 0
        %421 = vmatpush1.bf16.msra.mxu0 %v402
        %422 = vmatprep.subr.bf16.mxu0 0
        %423 = vmatpush1.bf16.msra.mxu0 %v403
        %424 = vmatprep.subr.bf16.mxu0 0
        %425 = vmatpush1.bf16.msra.mxu0 %v404
        %426 = vmatprep.subr.bf16.mxu0 0
        %427 = vmatpush1.bf16.msra.mxu0 %v405
        %428 = vmatprep.subr.bf16.mxu0 0
        %429 = vmatpush1.bf16.msra.mxu0 %v406
        %430 = vmatprep.subr.bf16.mxu0 0
        %431 = vmatpush1.bf16.msra.mxu0 %v407
        %432 = vmatprep.subr.bf16.mxu0 0
        %433 = vmatpush1.bf16.msra.mxu0 0
        %434 = vmatprep.subr.bf16.mxu0 0
        %435 = vmatpush1.bf16.msra.mxu0 0
        %436 = vmatprep.subr.bf16.mxu0 0
        %437 = vmatpush1.bf16.msra.mxu0 0
        %438 = vmatprep.subr.bf16.mxu0 0
        %439 = vmatpush1.bf16.msra.mxu0 0
        %440 = vmatprep.subr.bf16.mxu0 0
        %441 = vmatpush1.bf16.msra.mxu0 0
        %442 = vmatprep.subr.bf16.mxu0 0
        %443 = vmatpush1.bf16.msra.mxu0 0
        %444 = vmatprep.subr.bf16.mxu0 0
        %445 = vmatpush1.bf16.msra.mxu0 0
        %446 = vmatprep.subr.bf16.mxu0 0
        %447 = vmatpush1.bf16.msra.mxu0 0
        %448 = vmatprep.mubr.bf16.mxu0 0
        %449 = vmatmul.mubr.bf16.gmra.mrb[0].mxu0 %v360
        %v450 = vpop.f32.mrb[0].mxu0
        %v451 = vadd.f32 0.0, %v450
        %v452 = vpop.f32.mrb[0].mxu0
        %v453 = vpop.f32.mrb[0].mxu0
        %v454 = vadd.f32 0.0, %v453
        %v455 = vpop.f32.mrb[0].mxu0
        %456 = vmatprep.mubr.bf16.mxu0 0
        %457 = vmatmul.mubr.bf16.gmra.mrb[0].mxu0 %v361
        %v458 = vpop.f32.mrb[0].mxu0
        %v459 = vadd.f32 0.0, %v458
        %v460 = vpop.f32.mrb[0].mxu0
        %v461 = vpop.f32.mrb[0].mxu0
        %v462 = vadd.f32 0.0, %v461
        %v463 = vpop.f32.mrb[0].mxu0
        %464 = vmatprep.mubr.bf16.mxu0 0
        %465 = vmatmul.mubr.bf16.gmra.mrb[0].mxu0 %v362
        %v466 = vpop.f32.mrb[0].mxu0
        %v467 = vadd.f32 0.0, %v466
        %v468 = vpop.f32.mrb[0].mxu0
        %v469 = vpop.f32.mrb[0].mxu0
        %v470 = vadd.f32 0.0, %v469
        %v471 = vpop.f32.mrb[0].mxu0
        %472 = vmatprep.mubr.bf16.mxu0 0
        %473 = vmatmul.mubr.bf16.gmra.mrb[0].mxu0 %v363
        %v474 = vpop.f32.mrb[0].mxu0
        %v475 = vadd.f32 0.0, %v474
        %v476 = vpop.f32.mrb[0].mxu0
        %v477 = vpop.f32.mrb[0].mxu0
        %v478 = vadd.f32 0.0, %v477
        %v479 = vpop.f32.mrb[0].mxu0
        %480 = vmatprep.mubr.bf16.mxu0 0
        %481 = vmatmul.mubr.bf16.gmra.mrb[0].mxu0 %v364
        %v482 = vpop.f32.mrb[0].mxu0
        %v483 = vadd.f32 0.0, %v482
        %v484 = vpop.f32.mrb[0].mxu0
        %v485 = vpop.f32.mrb[0].mxu0
        %v486 = vadd.f32 0.0, %v485
        %v487 = vpop.f32.mrb[0].mxu0
        %488 = vmatprep.mubr.bf16.mxu0 0
        %489 = vmatmul.mubr.bf16.gmra.mrb[0].mxu0 %v365
        %v490 = vpop.f32.mrb[0].mxu0
        %v491 = vadd.f32 0.0, %v490
        %v492 = vpop.f32.mrb[0].mxu0
        %v493 = vpop.f32.mrb[0].mxu0
        %v494 = vadd.f32 0.0, %v493
        %v495 = vpop.f32.mrb[0].mxu0
        %496 = vmatprep.mubr.bf16.mxu0 0
        %497 = vmatmul.mubr.bf16.gmra.mrb[0].mxu0 %v366
        %v498 = vpop.f32.mrb[0].mxu0
        %v499 = vadd.f32 0.0, %v498
        %v500 = vpop.f32.mrb[0].mxu0
        %v501 = vpop.f32.mrb[0].mxu0
        %v502 = vadd.f32 0.0, %v501
        %v503 = vpop.f32.mrb[0].mxu0
        %504 = vmatprep.mubr.bf16.mxu0 0
        %505 = vmatmul.mubr.bf16.gmra.mrb[0].mxu0 %v367
        %v506 = vpop.f32.mrb[0].mxu0
        %v507 = vadd.f32 0.0, %v506
        %v508 = vpop.f32.mrb[0].mxu0
        %v509 = vpop.f32.mrb[0].mxu0
        %v510 = vadd.f32 0.0, %v509
        %v511 = vpop.f32.mrb[0].mxu0
        %512 = vdwg.mxu0
        %p513 = scmp.eq.s32.totalorder %s21, 0
        // Predicated region
        $region79: #{gcn_forward.11} parent=73 // pred_check
          %p514 = pneg %p513
        $region80: #{gcn_forward.11} parent=73 // pred_check_branch
          %516 = sbr.rel (%p514) target = $region82
        $region81: #{gcn_forward.11} parent=73 // pred_region
          %517 = vst [vmem:[#allocation2] sm:$0xff] %v451
          %518 = vst [vmem:[#allocation2 + $0x8] sm:$0xff] %v454
          %519 = vst [vmem:[#allocation2 + $0x10] sm:$0xff] %v459
          %520 = vst [vmem:[#allocation2 + $0x18] sm:$0xff] %v462
          %521 = vst [vmem:[#allocation2 + $0x20] sm:$0xff] %v467
          %522 = vst [vmem:[#allocation2 + $0x28] sm:$0xff] %v470
          %523 = vst [vmem:[#allocation2 + $0x30] sm:$0xff] %v475
          %524 = vst [vmem:[#allocation2 + $0x38] sm:$0xff] %v478
          %525 = vst [vmem:[#allocation2 + $0x40] sm:$0xff] %v483
          %526 = vst [vmem:[#allocation2 + $0x48] sm:$0xff] %v486
          %527 = vst [vmem:[#allocation2 + $0x50] sm:$0xff] %v491
          %528 = vst [vmem:[#allocation2 + $0x58] sm:$0xff] %v494
          %529 = vst [vmem:[#allocation2 + $0x60] sm:$0xff] %v499
          %530 = vst [vmem:[#allocation2 + $0x68] sm:$0xff] %v502
          %531 = vst [vmem:[#allocation2 + $0x70] sm:$0xff] %v507
          %532 = vst [vmem:[#allocation2 + $0x78] sm:$0xff] %v510
        $region82: #{gcn_forward.11} parent=73 // pred_fallthru
          _
        %p533 = scmp.ne.s32.totalorder %s21, 0
        // Predicated region
        $region83: #{gcn_forward.11} parent=73 // pred_check
          %p534 = pneg %p533
        $region84: #{gcn_forward.11} parent=73 // pred_check_branch
          %536 = sbr.rel (%p534) target = $region86
        $region85: #{gcn_forward.11} parent=73 // pred_region
          %v537 = vld [vmem:[#allocation2] sm:$0xff]
          %v538 = vld [vmem:[#allocation2 + $0x8] sm:$0xff]
          %v539 = vld [vmem:[#allocation2 + $0x10] sm:$0xff]
          %v540 = vld [vmem:[#allocation2 + $0x18] sm:$0xff]
          %v541 = vld [vmem:[#allocation2 + $0x20] sm:$0xff]
          %v542 = vld [vmem:[#allocation2 + $0x28] sm:$0xff]
          %v543 = vld [vmem:[#allocation2 + $0x30] sm:$0xff]
          %v544 = vld [vmem:[#allocation2 + $0x38] sm:$0xff]
          %v545 = vld [vmem:[#allocation2 + $0x40] sm:$0xff]
          %v546 = vld [vmem:[#allocation2 + $0x48] sm:$0xff]
          %v547 = vld [vmem:[#allocation2 + $0x50] sm:$0xff]
          %v548 = vld [vmem:[#allocation2 + $0x58] sm:$0xff]
          %v549 = vld [vmem:[#allocation2 + $0x60] sm:$0xff]
          %v550 = vld [vmem:[#allocation2 + $0x68] sm:$0xff]
          %v551 = vld [vmem:[#allocation2 + $0x70] sm:$0xff]
          %v552 = vld [vmem:[#allocation2 + $0x78] sm:$0xff]
          %v553 = vadd.f32 %v537, %v451
          %v554 = vadd.f32 %v538, %v454
          %v555 = vadd.f32 %v539, %v459
          %v556 = vadd.f32 %v540, %v462
          %v557 = vadd.f32 %v541, %v467
          %v558 = vadd.f32 %v542, %v470
          %v559 = vadd.f32 %v543, %v475
          %v560 = vadd.f32 %v544, %v478
          %v561 = vadd.f32 %v545, %v483
          %v562 = vadd.f32 %v546, %v486
          %v563 = vadd.f32 %v547, %v491
          %v564 = vadd.f32 %v548, %v494
          %v565 = vadd.f32 %v549, %v499
          %v566 = vadd.f32 %v550, %v502
          %v567 = vadd.f32 %v551, %v507
          %v568 = vadd.f32 %v552, %v510
          %569 = vst [vmem:[#allocation2] sm:$0xff] %v553
          %570 = vst [vmem:[#allocation2 + $0x8] sm:$0xff] %v554
          %571 = vst [vmem:[#allocation2 + $0x10] sm:$0xff] %v555
          %572 = vst [vmem:[#allocation2 + $0x18] sm:$0xff] %v556
          %573 = vst [vmem:[#allocation2 + $0x20] sm:$0xff] %v557
          %574 = vst [vmem:[#allocation2 + $0x28] sm:$0xff] %v558
          %575 = vst [vmem:[#allocation2 + $0x30] sm:$0xff] %v559
          %576 = vst [vmem:[#allocation2 + $0x38] sm:$0xff] %v560
          %577 = vst [vmem:[#allocation2 + $0x40] sm:$0xff] %v561
          %578 = vst [vmem:[#allocation2 + $0x48] sm:$0xff] %v562
          %579 = vst [vmem:[#allocation2 + $0x50] sm:$0xff] %v563
          %580 = vst [vmem:[#allocation2 + $0x58] sm:$0xff] %v564
          %581 = vst [vmem:[#allocation2 + $0x60] sm:$0xff] %v565
          %582 = vst [vmem:[#allocation2 + $0x68] sm:$0xff] %v566
          %583 = vst [vmem:[#allocation2 + $0x70] sm:$0xff] %v567
          %584 = vst [vmem:[#allocation2 + $0x78] sm:$0xff] %v568
        $region86: #{gcn_forward.11} parent=73 // pred_fallthru
          _
        %p585 = scmp.eq.s32.totalorder %s21, 2
        // Predicated region
        $region87: #{gcn_forward.11} parent=73 // pred_check
          %p586 = pneg %p585
        $region88: #{gcn_forward.11} parent=73 // pred_check_branch
          %588 = sbr.rel (%p586) target = $region90
        $region89: #{gcn_forward.11} parent=73 // pred_region
          %v589 = vld [vmem:[#allocation2] sm:$0xff]
          %v590 = vld [vmem:[#allocation2 + $0x8] sm:$0xff]
          %v591 = vld [vmem:[#allocation2 + $0x10] sm:$0xff]
          %v592 = vld [vmem:[#allocation2 + $0x18] sm:$0xff]
          %v593 = vld [vmem:[#allocation2 + $0x20] sm:$0xff]
          %v594 = vld [vmem:[#allocation2 + $0x28] sm:$0xff]
          %v595 = vld [vmem:[#allocation2 + $0x30] sm:$0xff]
          %v596 = vld [vmem:[#allocation2 + $0x38] sm:$0xff]
          %v597 = vld [vmem:[#allocation2 + $0x40] sm:$0xff]
          %v598 = vld [vmem:[#allocation2 + $0x48] sm:$0xff]
          %v599 = vld [vmem:[#allocation2 + $0x50] sm:$0xff]
          %v600 = vld [vmem:[#allocation2 + $0x58] sm:$0xff]
          %v601 = vld [vmem:[#allocation2 + $0x60] sm:$0xff]
          %v602 = vld [vmem:[#allocation2 + $0x68] sm:$0xff]
          %v603 = vld [vmem:[#allocation2 + $0x70] sm:$0xff]
          %v604 = vld [vmem:[#allocation2 + $0x78] sm:$0xff]
          %v605 = vld [vmem:[%s320] sm:$0xff]
          %v606 = vld [vmem:[%s320 + $0x8] sm:$0xff]
          %v607 = vld [vmem:[%s320 + $0x10] sm:$0xff]
          %v608 = vld [vmem:[%s320 + $0x18] sm:$0xff]
          %v609 = vld [vmem:[%s320 + $0x20] sm:$0xff]
          %v610 = vld [vmem:[%s320 + $0x28] sm:$0xff]
          %v611 = vld [vmem:[%s320 + $0x30] sm:$0xff]
          %v612 = vld [vmem:[%s320 + $0x38] sm:$0xff]
          %v613 = vld [vmem:[%s320 + $0x40] sm:$0xff]
          %v614 = vld [vmem:[%s320 + $0x48] sm:$0xff]
          %v615 = vld [vmem:[%s320 + $0x50] sm:$0xff]
          %v616 = vld [vmem:[%s320 + $0x58] sm:$0xff]
          %v617 = vld [vmem:[%s320 + $0x60] sm:$0xff]
          %v618 = vld [vmem:[%s320 + $0x68] sm:$0xff]
          %v619 = vld [vmem:[%s320 + $0x70] sm:$0xff]
          %v620 = vld [vmem:[%s320 + $0x78] sm:$0xff]
          %622 = vset.pattern.permute.xlu0 0
          %623 = vperm.xlu0 %622, %v605
          %v624 = vpop.permute.xlu0 %623
          %627 = vset.pattern.permute.xlu0 0
          %628 = vperm.xlu0 %627, %v606
          %v629 = vpop.permute.xlu0 %628
          %632 = vset.pattern.permute.xlu0 0
          %633 = vperm.xlu0 %632, %v607
          %v634 = vpop.permute.xlu0 %633
          %637 = vset.pattern.permute.xlu0 0
          %638 = vperm.xlu0 %637, %v608
          %v639 = vpop.permute.xlu0 %638
          %642 = vset.pattern.permute.xlu0 0
          %643 = vperm.xlu0 %642, %v609
          %v644 = vpop.permute.xlu0 %643
          %647 = vset.pattern.permute.xlu0 0
          %648 = vperm.xlu0 %647, %v610
          %v649 = vpop.permute.xlu0 %648
          %652 = vset.pattern.permute.xlu0 0
          %653 = vperm.xlu0 %652, %v611
          %v654 = vpop.permute.xlu0 %653
          %657 = vset.pattern.permute.xlu0 0
          %658 = vperm.xlu0 %657, %v612
          %v659 = vpop.permute.xlu0 %658
          %662 = vset.pattern.permute.xlu0 0
          %663 = vperm.xlu0 %662, %v613
          %v664 = vpop.permute.xlu0 %663
          %667 = vset.pattern.permute.xlu0 0
          %668 = vperm.xlu0 %667, %v614
          %v669 = vpop.permute.xlu0 %668
          %672 = vset.pattern.permute.xlu0 0
          %673 = vperm.xlu0 %672, %v615
          %v674 = vpop.permute.xlu0 %673
          %677 = vset.pattern.permute.xlu0 0
          %678 = vperm.xlu0 %677, %v616
          %v679 = vpop.permute.xlu0 %678
          %682 = vset.pattern.permute.xlu0 0
          %683 = vperm.xlu0 %682, %v617
          %v684 = vpop.permute.xlu0 %683
          %687 = vset.pattern.permute.xlu0 0
          %688 = vperm.xlu0 %687, %v618
          %v689 = vpop.permute.xlu0 %688
          %692 = vset.pattern.permute.xlu0 0
          %693 = vperm.xlu0 %692, %v619
          %v694 = vpop.permute.xlu0 %693
          %697 = vset.pattern.permute.xlu0 0
          %698 = vperm.xlu0 %697, %v620
          %v699 = vpop.permute.xlu0 %698
          %v701 = vmul.f32 %v589, %v624
          %v702 = vmul.f32 %v590, %v629
          %v703 = vmul.f32 %v591, %v634
          %v704 = vmul.f32 %v592, %v639
          %v705 = vmul.f32 %v593, %v644
          %v706 = vmul.f32 %v594, %v649
          %v707 = vmul.f32 %v595, %v654
          %v708 = vmul.f32 %v596, %v659
          %v709 = vmul.f32 %v597, %v664
          %v710 = vmul.f32 %v598, %v669
          %v711 = vmul.f32 %v599, %v674
          %v712 = vmul.f32 %v600, %v679
          %v713 = vmul.f32 %v601, %v684
          %v714 = vmul.f32 %v602, %v689
          %v715 = vmul.f32 %v603, %v694
          %v716 = vmul.f32 %v604, %v699
          %v717 = vld [vmem:[%s326] sm:$0xf]
          %v718 = vld [vmem:[%s326 + $0x4] sm:$0xf]
          %v719 = vld [vmem:[%s326 + $0x8] sm:$0xf]
          %v720 = vld [vmem:[%s326 + $0xc] sm:$0xf]
          %v721 = vld [vmem:[%s326 + $0x10] sm:$0xf]
          %v722 = vld [vmem:[%s326 + $0x14] sm:$0xf]
          %v723 = vld [vmem:[%s326 + $0x18] sm:$0xf]
          %v724 = vld [vmem:[%s326 + $0x1c] sm:$0xf]
          %v725 = vld [vmem:[%s326 + $0x20] sm:$0xf]
          %v726 = vld [vmem:[%s326 + $0x24] sm:$0xf]
          %v727 = vld [vmem:[%s326 + $0x28] sm:$0xf]
          %v728 = vld [vmem:[%s326 + $0x2c] sm:$0xf]
          %v729 = vld [vmem:[%s326 + $0x30] sm:$0xf]
          %v730 = vld [vmem:[%s326 + $0x34] sm:$0xf]
          %v731 = vld [vmem:[%s326 + $0x38] sm:$0xf]
          %v732 = vld [vmem:[%s326 + $0x3c] sm:$0xf]
          %v733 = vunpack.c.l.bf16 %v717
          %v734 = vunpack.c.l.bf16 %v718
          %v735 = vunpack.c.l.bf16 %v719
          %v736 = vunpack.c.l.bf16 %v720
          %v737 = vunpack.c.l.bf16 %v721
          %v738 = vunpack.c.l.bf16 %v722
          %v739 = vunpack.c.l.bf16 %v723
          %v740 = vunpack.c.l.bf16 %v724
          %v741 = vunpack.c.l.bf16 %v725
          %v742 = vunpack.c.l.bf16 %v726
          %v743 = vunpack.c.l.bf16 %v727
          %v744 = vunpack.c.l.bf16 %v728
          %v745 = vunpack.c.l.bf16 %v729
          %v746 = vunpack.c.l.bf16 %v730
          %v747 = vunpack.c.l.bf16 %v731
          %v748 = vunpack.c.l.bf16 %v732
          %v749 = vadd.f32 %v701, %v733
          %v750 = vadd.f32 %v702, %v734
          %v751 = vadd.f32 %v703, %v735
          %v752 = vadd.f32 %v704, %v736
          %v753 = vadd.f32 %v705, %v737
          %v754 = vadd.f32 %v706, %v738
          %v755 = vadd.f32 %v707, %v739
          %v756 = vadd.f32 %v708, %v740
          %v757 = vadd.f32 %v709, %v741
          %v758 = vadd.f32 %v710, %v742
          %v759 = vadd.f32 %v711, %v743
          %v760 = vadd.f32 %v712, %v744
          %v761 = vadd.f32 %v713, %v745
          %v762 = vadd.f32 %v714, %v746
          %v763 = vadd.f32 %v715, %v747
          %v764 = vadd.f32 %v716, %v748
          %v765 = vld [vmem:[%s4] sm:$0x1]
          %v767 = vlaneseq
          %v768 = vshrl.u32 %v767, 7
          %v769 = vsub.s32 0, %v768
          %v770 = vrot.slane %v765, %v769
          %v772 = vadd.f32 %v749, %v770
          %v773 = vadd.f32 %v750, %v770
          %v774 = vadd.f32 %v751, %v770
          %v775 = vadd.f32 %v752, %v770
          %v776 = vadd.f32 %v753, %v770
          %v777 = vadd.f32 %v754, %v770
          %v778 = vadd.f32 %v755, %v770
          %v779 = vadd.f32 %v756, %v770
          %v780 = vadd.f32 %v757, %v770
          %v781 = vadd.f32 %v758, %v770
          %v782 = vadd.f32 %v759, %v770
          %v783 = vadd.f32 %v760, %v770
          %v784 = vadd.f32 %v761, %v770
          %v785 = vadd.f32 %v762, %v770
          %v786 = vadd.f32 %v763, %v770
          %v787 = vadd.f32 %v764, %v770
          %788 = vst [vmem:[%s332] sm:$0xff] %v772
          %789 = vst [vmem:[%s332 + $0x8] sm:$0xff] %v773
          %790 = vst [vmem:[%s332 + $0x10] sm:$0xff] %v774
          %791 = vst [vmem:[%s332 + $0x18] sm:$0xff] %v775
          %792 = vst [vmem:[%s332 + $0x20] sm:$0xff] %v776
          %793 = vst [vmem:[%s332 + $0x28] sm:$0xff] %v777
          %794 = vst [vmem:[%s332 + $0x30] sm:$0xff] %v778
          %795 = vst [vmem:[%s332 + $0x38] sm:$0xff] %v779
          %796 = vst [vmem:[%s332 + $0x40] sm:$0xff] %v780
          %797 = vst [vmem:[%s332 + $0x48] sm:$0xff] %v781
          %798 = vst [vmem:[%s332 + $0x50] sm:$0xff] %v782
          %799 = vst [vmem:[%s332 + $0x58] sm:$0xff] %v783
          %800 = vst [vmem:[%s332 + $0x60] sm:$0xff] %v784
          %801 = vst [vmem:[%s332 + $0x68] sm:$0xff] %v785
          %802 = vst [vmem:[%s332 + $0x70] sm:$0xff] %v786
          %803 = vst [vmem:[%s332 + $0x78] sm:$0xff] %v787
        $region90: #{gcn_forward.11} parent=73 // pred_fallthru
          _
        %s804 = smul.u32 16, %s20
        %p805 = scmp.lt.s32.totalorder %s804, 47
        %s806 = scalar_select %p805, %s804, 47
        %s807 = smul.addr %s806, 8
        %s808 = scalar_lea.vmem %s5, %s807
        // Predicated region
        $region91: #{gcn_forward.11} parent=73 // pred_check
          %p809 = pneg %p168
        $region92: #{gcn_forward.11} parent=73 // pred_check_branch
          %811 = sbr.rel (%p809) target = $region94
        $region93: #{gcn_forward.11} parent=73 // pred_region
          %s812 = smul.u32 16, %s20
        $region94: #{gcn_forward.11} parent=73 // pred_fallthru
          _
      $region74: #{gcn_forward.11} parent=5 // pred_fallthru
        _
      %p813 = scmp.le.s32.totalorder 2, %s11
      // Predicated region
      $region95: #{gcn_forward.11} parent=5 // pred_check
        %p814 = pneg %p813
      $region96: #{gcn_forward.11} parent=5 // pred_check_branch
        %816 = sbr.rel (%p814) target = $region98
      $region97: #{gcn_forward.11} parent=5 // pred_region
        %s817 = ssub.s32 %s11, 2
        // Predicated region
        $region99: #{gcn_forward.11} parent=97 // pred_check
          %p818 = pneg %p174
        $region100: #{gcn_forward.11} parent=97 // pred_check_branch
          %820 = sbr.rel (%p818) target = $region102
        $region101: #{gcn_forward.11} parent=97 // pred_region
          %s821 = smul.u32 16, %s22
          %p822 = scmp.lt.s32.totalorder %s821, 47
          %s823 = scalar_select %p822, %s821, 47
          %s824 = smul.addr %s823, 8
          %s825 = scalar_lea.vmem %s5, %s824
        $region102: #{gcn_forward.11} parent=97 // pred_fallthru
          _
      $region98: #{gcn_forward.11} parent=5 // pred_fallthru
        _
    $region6: #{gcn_forward.11} parent=1 // loop_footer
      %s15 = sadd.s32 1, %s11
    $region7: #{gcn_forward.11} parent=1 // loop_footer_branch
      %10 = sbr.rel target = $region3
    $region8: #{gcn_forward.11} parent=1 // loop_exit
      _

</llo_original>
